<compile_context>
chip_gen: v6e
topology: v6e:2x2x1
jax: 0.10.0
libtpu: 0.0.40
codegen_flags: <defaults>
</compile_context>

<pallas_src>
import functools

import jax
import jax.numpy as jnp
from jax.experimental import pallas as pl
from jax.experimental.pallas import tpu as pltpu


def nonlocal_kernel(x_ref, mask_ref, wk_ref, bk_ref, wq_ref, bq_ref, wv2_ref, bv2_ref,
                    out_ref, *, odim, nheads):
    """One batch-block per grid step.

    x_ref:    [block_b, nseg, idim]   multimodal features
    mask_ref: [block_b, 1, nseg]      float mask (0 => masked key/column)
    wk_ref:   [idim, odim]            v_lin weight (transposed: x @ W)
    bk_ref:   [1, odim]
    wq_ref:   [idim, odim]            first half of c_lin (transposed)
    bq_ref:   [1, odim]
    wv2_ref:  [idim, odim]            second half of c_lin (transposed)
    bv2_ref:  [1, odim]
    out_ref:  [block_b, nseg, idim]
    """
    block_b, nseg, idim = x_ref.shape
    hd = odim // nheads
    scale = jnp.float32(1.0 / (hd ** 0.5))

    x = x_ref[...]                                     # [block_b, nseg, idim]
    xf = x.reshape(block_b * nseg, idim)               # merge leading dims -> bigger MXU M

    # Three lane-aligned projection matmuls (no slicing of a fused 2*odim output).
    m_k = jnp.dot(xf, wk_ref[...], preferred_element_type=jnp.float32) + bk_ref[...]
    m_q = jnp.dot(xf, wq_ref[...], preferred_element_type=jnp.float32) + bq_ref[...]
    m_v = jnp.dot(xf, wv2_ref[...], preferred_element_type=jnp.float32) + bv2_ref[...]

    # Head-batched layout: z = (head, batch_row) -> [nheads*block_b, nseg, hd].
    def to_heads(m):                                   # m: [block_b*nseg, odim]
        parts = [m[:, h * hd:(h + 1) * hd] for h in range(nheads)]   # static slices
        return jnp.concatenate(parts, axis=0).reshape(nheads * block_b, nseg, hd)

    kz = to_heads(m_k)
    qz = to_heads(m_q)
    vz = to_heads(m_v)

    # Additive key-mask bias, computed once and broadcast over heads (no per-head where()).
    maskb = mask_ref[...]                              # [block_b, 1, nseg]
    bias = jnp.where(maskb == 0.0, jnp.float32(-1e9), jnp.float32(0.0))
    bias = jnp.broadcast_to(bias[None, :, :, :], (nheads, block_b, 1, nseg))
    bias = bias.reshape(nheads * block_b, 1, nseg)     # [nheads*block_b, 1, nseg]

    # Scores: s[z, k, q] = <k_z[k], q_z[q]> / sqrt(hd), mask on column axis, softmax over it
    # (matches the PyTorch reference: masked_fill on dim=2 then softmax(dim=2)).
    s = jnp.einsum("zkd,zqd->zkq", kz, qz, preferred_element_type=jnp.float32) * scale + bias
    s_max = jnp.max(s, axis=-1, keepdims=True)
    p = jnp.exp(s - s_max)
    inv = pl.reciprocal(jnp.sum(p, axis=-1, keepdims=True), approx=True)   # EUP, not VALU
    p = p * inv

    # PV: one batched matmul, then re-assemble heads along the feature (lane) axis.
    r = jnp.einsum("zkq,zqd->zkd", p, vz, preferred_element_type=jnp.float32)
    r = r.reshape(nheads, block_b, nseg, hd)
    r = jnp.concatenate([r[h] for h in range(nheads)], axis=-1)            # [block_b, nseg, odim]

    out_ref[...] = (x + r).astype(out_ref.dtype)       # residual: updated_m = m_feats + r


def nonlocal_block(m_feats, mask, wc, bc, wv, bv, *, nheads, block_b=None):
    """m_feats: [B, nseg, idim] f32; mask: [B, nseg]; wc: [2*odim, idim]; wv: [odim, idim]."""
    B, nseg, idim = m_feats.shape
    odim = idim                                   # module uses EMB_DIM for both (residual needs it)
    assert wc.shape == (2 * odim, idim), "c_lin weight must be [2*odim, idim] with odim == idim"
    assert wv.shape == (odim, idim), "v_lin weight must be [odim, idim] with odim == idim"
    assert odim % nheads == 0, "odim must be divisible by nheads"

    if block_b is None:
        # Amortize per-step overhead, but keep >= 2 grid steps when possible (v7x has 2 TCs).
        block_b = B // 2 if (B % 2 == 0 and B >= 2) else 1
    assert B % block_b == 0, "B must be divisible by block_b"
    grid_b = B // block_b

    # Split c_lin in the wrapper so the kernel never slices at a non-lane-aligned offset.
    wq_t = wc[:odim, :].T                         # [idim, odim]  (query projection)
    wv2_t = wc[odim:, :].T                        # [idim, odim]  (value projection)
    wk_t = wv.T                                   # [idim, odim]  (key projection = v_lin)
    bq = bc[:odim].reshape(1, odim)
    bv2 = bc[odim:].reshape(1, odim)
    bk = bv.reshape(1, odim)
    mask_r = mask.astype(jnp.float32).reshape(B, 1, nseg)

    kernel = functools.partial(nonlocal_kernel, odim=odim, nheads=nheads)

    # Explicit VMEM budget (double-buffered I/O + resident weights + headroom), clamped to the
    # v7x physical limit so the same setting is valid on v5e/v6e/v7x.
    f32 = 4
    io_bytes = 2 * 2 * (block_b * nseg * idim * f32)         # x + out blocks, double-buffered
    mask_bytes = 2 * (block_b * nseg * f32)
    w_bytes = 2 * (3 * idim * odim + 3 * odim) * f32
    vmem_limit = int(min(64 * 1024 * 1024, io_bytes + mask_bytes + w_bytes + (8 << 20)))

    return pl.pallas_call(
        kernel,
        out_shape=jax.ShapeDtypeStruct((B, nseg, idim), m_feats.dtype),
        grid_spec=pltpu.PrefetchScalarGridSpec(
            num_scalar_prefetch=0,
            grid=(grid_b,),
            in_specs=[
                pl.BlockSpec((block_b, nseg, idim), lambda b: (b, 0, 0)),   # m_feats block
                pl.BlockSpec((block_b, 1, nseg), lambda b: (b, 0, 0)),      # mask block
                pl.BlockSpec((idim, odim), lambda b: (0, 0)),               # wk_t  (resident)
                pl.BlockSpec((1, odim), lambda b: (0, 0)),                  # bk
                pl.BlockSpec((idim, odim), lambda b: (0, 0)),               # wq_t  (resident)
                pl.BlockSpec((1, odim), lambda b: (0, 0)),                  # bq
                pl.BlockSpec((idim, odim), lambda b: (0, 0)),               # wv2_t (resident)
                pl.BlockSpec((1, odim), lambda b: (0, 0)),                  # bv2
            ],
            out_specs=pl.BlockSpec((block_b, nseg, idim), lambda b: (b, 0, 0)),
        ),
        compiler_params=pltpu.CompilerParams(
            dimension_semantics=("parallel",),
            vmem_limit_bytes=vmem_limit,
        ),
    )(m_feats, mask_r, wk_t, bk, wq_t, bq, wv2_t, bv2)


def nonlocal_block_ref(m_feats, mask, wc, bc, wv, bv, *, nheads):
    """Pure-JAX reference mirroring the PyTorch forward (dropout = identity)."""
    mask = mask.astype(jnp.float32)
    odim = m_feats.shape[-1]
    hd = odim // nheads
    m_k = m_feats @ wv.T + bv
    m_trans = m_feats @ wc.T + bc
    m_q, m_v = m_trans[..., :odim], m_trans[..., odim:]
    outs = []
    for h in range(nheads):
        k_h = m_k[..., h * hd:(h + 1) * hd]
        q_h = m_q[..., h * hd:(h + 1) * hd]
        v_h = m_v[..., h * hd:(h + 1) * hd]
        s = jnp.einsum("bkd,bqd->bkq", k_h, q_h) / (hd ** 0.5)
        s = jnp.where(mask[:, None, :] == 0.0, -1e9, s)
        p = jax.nn.softmax(s, axis=2)
        outs.append(jnp.einsum("bkq,bqd->bkd", p, v_h))
    return m_feats + jnp.concatenate(outs, axis=-1)


if __name__ == "__main__":
    # Config (stands in for cfg.MODEL.FUSION.EMB_DIM etc.)
    B, nseg, idim = 4, 8, 32
    odim, nheads, use_bias = idim, 4, True

    key = jax.random.PRNGKey(0)
    k1, k2, k3, k4, k5 = jax.random.split(key, 5)

    m_feats = jax.random.normal(k1, (B, nseg, idim), dtype=jnp.float32)
    # Mask: some trailing segments are padding.
    mask = jnp.ones((B, nseg), dtype=jnp.float32)
    mask = mask.at[1, -2:].set(0.0)
    mask = mask.at[3, -3:].set(0.0)

    # Deterministic parameter init (Linear weight shapes: [out, in]).
    wc = jax.random.normal(k2, (2 * odim, idim), dtype=jnp.float32) * 0.05
    bc = (jax.random.normal(k3, (2 * odim,), dtype=jnp.float32) * 0.05
          if use_bias else jnp.zeros((2 * odim,), jnp.float32))
    wv = jax.random.normal(k4, (odim, idim), dtype=jnp.float32) * 0.05
    bv = (jax.random.normal(k5, (odim,), dtype=jnp.float32) * 0.05
          if use_bias else jnp.zeros((odim,), jnp.float32))

    out = nonlocal_block(m_feats, mask, wc, bc, wv, bv, nheads=nheads)
    out = jax.block_until_ready(out)

    ref = nonlocal_block_ref(m_feats, mask, wc, bc, wv, bv, nheads=nheads)
    assert out.shape == (B, nseg, idim)
    # Slightly relaxed tolerance: softmax denominator uses the EUP approximate reciprocal.
    assert jnp.allclose(out, ref, atol=1e-3, rtol=1e-3), "mismatch vs JAX reference"

    print("KERNEL_OK")
</pallas_src>

<mosaic_0001>
module attributes {stable_mosaic.version = 11 : i64} {
  func.func @nonlocal_kernel(%arg0: i32, %arg1: memref<2x8x32xf32, #tpu.memory_space<vmem>>, %arg2: memref<2x1x8xf32, #tpu.memory_space<vmem>>, %arg3: memref<32x32xf32, #tpu.memory_space<vmem>>, %arg4: memref<1x32xf32, #tpu.memory_space<vmem>>, %arg5: memref<32x32xf32, #tpu.memory_space<vmem>>, %arg6: memref<1x32xf32, #tpu.memory_space<vmem>>, %arg7: memref<32x32xf32, #tpu.memory_space<vmem>>, %arg8: memref<1x32xf32, #tpu.memory_space<vmem>>, %arg9: memref<2x8x32xf32, #tpu.memory_space<vmem>>) attributes {dimension_semantics = [#tpu.dimension_semantics<parallel>], iteration_bounds = array<i64: 2>, scalar_prefetch = 0 : i64, scratch_operands = 0 : i64, tpu.core_type = #tpu.core_type<tc>, window_params = [{transform_indices = @transform_0, window_bounds = array<i64: 2, 8, 32>}, {transform_indices = @transform_1, window_bounds = array<i64: 2, 1, 8>}, {pipeline_mode = #tpu.pipeline_mode<synchronous>, transform_indices = @transform_2, window_bounds = array<i64: 32, 32>}, {pipeline_mode = #tpu.pipeline_mode<synchronous>, transform_indices = @transform_3, window_bounds = array<i64: 1, 32>}, {pipeline_mode = #tpu.pipeline_mode<synchronous>, transform_indices = @transform_4, window_bounds = array<i64: 32, 32>}, {pipeline_mode = #tpu.pipeline_mode<synchronous>, transform_indices = @transform_5, window_bounds = array<i64: 1, 32>}, {pipeline_mode = #tpu.pipeline_mode<synchronous>, transform_indices = @transform_6, window_bounds = array<i64: 32, 32>}, {pipeline_mode = #tpu.pipeline_mode<synchronous>, transform_indices = @transform_7, window_bounds = array<i64: 1, 32>}, {transform_indices = @transform_8, window_bounds = array<i64: 2, 8, 32>}]} {
    %c0 = arith.constant 0 : index
    %c0_0 = arith.constant 0 : index
    %c0_1 = arith.constant 0 : index
    %0 = vector.load %arg1[%c0, %c0_0, %c0_1] : memref<2x8x32xf32, #tpu.memory_space<vmem>>, vector<2x8x32xf32>
    %1 = vector.shape_cast %0 : vector<2x8x32xf32> to vector<16x32xf32>
    %c0_2 = arith.constant 0 : index
    %c0_3 = arith.constant 0 : index
    %2 = vector.load %arg3[%c0_2, %c0_3] : memref<32x32xf32, #tpu.memory_space<vmem>>, vector<32x32xf32>
    %cst = arith.constant dense<0.000000e+00> : vector<16x32xf32>
    %3 = tpu.matmul %1, %2, %cst {dimension_numbers = #tpu.dot_dimension_numbers<[1], [0], [0], [1], [0, 0, 1, 1], [], []>} : vector<16x32xf32>, vector<32x32xf32>, vector<16x32xf32> -> vector<16x32xf32>
    %c0_4 = arith.constant 0 : index
    %c0_5 = arith.constant 0 : index
    %4 = vector.load %arg4[%c0_4, %c0_5] : memref<1x32xf32, #tpu.memory_space<vmem>>, vector<1x32xf32>
    %5 = vector.broadcast %4 : vector<1x32xf32> to vector<16x32xf32>
    %6 = arith.addf %3, %5 : vector<16x32xf32>
    %c0_6 = arith.constant 0 : index
    %c0_7 = arith.constant 0 : index
    %7 = vector.load %arg5[%c0_6, %c0_7] : memref<32x32xf32, #tpu.memory_space<vmem>>, vector<32x32xf32>
    %cst_8 = arith.constant dense<0.000000e+00> : vector<16x32xf32>
    %8 = tpu.matmul %1, %7, %cst_8 {dimension_numbers = #tpu.dot_dimension_numbers<[1], [0], [0], [1], [0, 0, 1, 1], [], []>} : vector<16x32xf32>, vector<32x32xf32>, vector<16x32xf32> -> vector<16x32xf32>
    %c0_9 = arith.constant 0 : index
    %c0_10 = arith.constant 0 : index
    %9 = vector.load %arg6[%c0_9, %c0_10] : memref<1x32xf32, #tpu.memory_space<vmem>>, vector<1x32xf32>
    %10 = vector.broadcast %9 : vector<1x32xf32> to vector<16x32xf32>
    %11 = arith.addf %8, %10 : vector<16x32xf32>
    %c0_11 = arith.constant 0 : index
    %c0_12 = arith.constant 0 : index
    %12 = vector.load %arg7[%c0_11, %c0_12] : memref<32x32xf32, #tpu.memory_space<vmem>>, vector<32x32xf32>
    %cst_13 = arith.constant dense<0.000000e+00> : vector<16x32xf32>
    %13 = tpu.matmul %1, %12, %cst_13 {dimension_numbers = #tpu.dot_dimension_numbers<[1], [0], [0], [1], [0, 0, 1, 1], [], []>} : vector<16x32xf32>, vector<32x32xf32>, vector<16x32xf32> -> vector<16x32xf32>
    %c0_14 = arith.constant 0 : index
    %c0_15 = arith.constant 0 : index
    %14 = vector.load %arg8[%c0_14, %c0_15] : memref<1x32xf32, #tpu.memory_space<vmem>>, vector<1x32xf32>
    %15 = vector.broadcast %14 : vector<1x32xf32> to vector<16x32xf32>
    %16 = arith.addf %13, %15 : vector<16x32xf32>
    %17 = vector.extract_strided_slice %6 {offsets = [0, 0], sizes = [16, 8], strides = [1, 1]} : vector<16x32xf32> to vector<16x8xf32>
    %18 = vector.extract_strided_slice %6 {offsets = [0, 8], sizes = [16, 8], strides = [1, 1]} : vector<16x32xf32> to vector<16x8xf32>
    %19 = vector.extract_strided_slice %6 {offsets = [0, 16], sizes = [16, 8], strides = [1, 1]} : vector<16x32xf32> to vector<16x8xf32>
    %20 = vector.extract_strided_slice %6 {offsets = [0, 24], sizes = [16, 8], strides = [1, 1]} : vector<16x32xf32> to vector<16x8xf32>
    %21 = tpu.concatenate %17, %18, %19, %20 in 0 : vector<16x8xf32>, vector<16x8xf32>, vector<16x8xf32>, vector<16x8xf32> -> vector<64x8xf32>
    %22 = vector.shape_cast %21 : vector<64x8xf32> to vector<8x8x8xf32>
    %23 = vector.extract_strided_slice %11 {offsets = [0, 0], sizes = [16, 8], strides = [1, 1]} : vector<16x32xf32> to vector<16x8xf32>
    %24 = vector.extract_strided_slice %11 {offsets = [0, 8], sizes = [16, 8], strides = [1, 1]} : vector<16x32xf32> to vector<16x8xf32>
    %25 = vector.extract_strided_slice %11 {offsets = [0, 16], sizes = [16, 8], strides = [1, 1]} : vector<16x32xf32> to vector<16x8xf32>
    %26 = vector.extract_strided_slice %11 {offsets = [0, 24], sizes = [16, 8], strides = [1, 1]} : vector<16x32xf32> to vector<16x8xf32>
    %27 = tpu.concatenate %23, %24, %25, %26 in 0 : vector<16x8xf32>, vector<16x8xf32>, vector<16x8xf32>, vector<16x8xf32> -> vector<64x8xf32>
    %28 = vector.shape_cast %27 : vector<64x8xf32> to vector<8x8x8xf32>
    %29 = vector.extract_strided_slice %16 {offsets = [0, 0], sizes = [16, 8], strides = [1, 1]} : vector<16x32xf32> to vector<16x8xf32>
    %30 = vector.extract_strided_slice %16 {offsets = [0, 8], sizes = [16, 8], strides = [1, 1]} : vector<16x32xf32> to vector<16x8xf32>
    %31 = vector.extract_strided_slice %16 {offsets = [0, 16], sizes = [16, 8], strides = [1, 1]} : vector<16x32xf32> to vector<16x8xf32>
    %32 = vector.extract_strided_slice %16 {offsets = [0, 24], sizes = [16, 8], strides = [1, 1]} : vector<16x32xf32> to vector<16x8xf32>
    %33 = tpu.concatenate %29, %30, %31, %32 in 0 : vector<16x8xf32>, vector<16x8xf32>, vector<16x8xf32>, vector<16x8xf32> -> vector<64x8xf32>
    %34 = vector.shape_cast %33 : vector<64x8xf32> to vector<8x8x8xf32>
    %c0_16 = arith.constant 0 : index
    %c0_17 = arith.constant 0 : index
    %c0_18 = arith.constant 0 : index
    %35 = vector.load %arg2[%c0_16, %c0_17, %c0_18] : memref<2x1x8xf32, #tpu.memory_space<vmem>>, vector<2x1x8xf32>
    %cst_19 = arith.constant 0.000000e+00 : f32
    %36 = vector.broadcast %cst_19 : f32 to vector<2x1x8xf32>
    %37 = arith.cmpf oeq, %35, %36 : vector<2x1x8xf32>
    %cst_20 = arith.constant -1.000000e+09 : f32
    %cst_21 = arith.constant 0.000000e+00 : f32
    %38 = vector.broadcast %cst_20 : f32 to vector<2x1x8xf32>
    %39 = vector.broadcast %cst_21 : f32 to vector<2x1x8xf32>
    %40 = arith.select %37, %38, %39 : vector<2x1x8xi1>, vector<2x1x8xf32>
    %41 = vector.shape_cast %40 : vector<2x1x8xf32> to vector<1x2x1x8xf32>
    %42 = vector.shape_cast %41 : vector<1x2x1x8xf32> to vector<1x2x1x8xf32>
    %43 = vector.broadcast %42 : vector<1x2x1x8xf32> to vector<4x2x1x8xf32>
    %44 = vector.shape_cast %43 : vector<4x2x1x8xf32> to vector<8x1x8xf32>
    "tpu.trace_start"() <{level = 10 : i32, message = "zkd,zqd->zkq"}> : () -> ()
    %cst_22 = arith.constant dense<0.000000e+00> : vector<8x8x8xf32>
    %45 = tpu.matmul %22, %28, %cst_22 {dimension_numbers = #tpu.dot_dimension_numbers<[2], [2], [1], [1], [0, 0, 0, 1, 1, 1], [0], [0]>} : vector<8x8x8xf32>, vector<8x8x8xf32>, vector<8x8x8xf32> -> vector<8x8x8xf32>
    "tpu.trace_stop"() : () -> ()
    %cst_23 = arith.constant 0.353553385 : f32
    %46 = vector.broadcast %cst_23 : f32 to vector<8x8x8xf32>
    %47 = arith.mulf %45, %46 : vector<8x8x8xf32>
    %48 = vector.broadcast %44 : vector<8x1x8xf32> to vector<8x8x8xf32>
    %49 = arith.addf %47, %48 : vector<8x8x8xf32>
    %cst_24 = arith.constant dense<0xFF800000> : vector<8x8xf32>
    %50 = vector.multi_reduction <maximumf>, %49, %cst_24 [2] : vector<8x8x8xf32> to vector<8x8xf32>
    %51 = vector.shape_cast %50 : vector<8x8xf32> to vector<8x8x1xf32>
    %52 = vector.broadcast %51 : vector<8x8x1xf32> to vector<8x8x8xf32>
    %53 = arith.subf %49, %52 : vector<8x8x8xf32>
    %54 = math.exp %53 : vector<8x8x8xf32>
    %cst_25 = arith.constant dense<0.000000e+00> : vector<8x8xf32>
    %55 = vector.multi_reduction <add>, %54, %cst_25 [2] : vector<8x8x8xf32> to vector<8x8xf32>
    %56 = vector.shape_cast %55 : vector<8x8xf32> to vector<8x8x1xf32>
    %57 = tpu.reciprocal %56 {approx = true} : vector<8x8x1xf32> -> vector<8x8x1xf32>
    %58 = vector.broadcast %57 : vector<8x8x1xf32> to vector<8x8x8xf32>
    %59 = arith.mulf %54, %58 : vector<8x8x8xf32>
    "tpu.trace_start"() <{level = 10 : i32, message = "zkq,zqd->zkd"}> : () -> ()
    %cst_26 = arith.constant dense<0.000000e+00> : vector<8x8x8xf32>
    %60 = tpu.matmul %59, %34, %cst_26 {dimension_numbers = #tpu.dot_dimension_numbers<[2], [1], [1], [2], [0, 0, 0, 1, 1, 2], [0], [0]>} : vector<8x8x8xf32>, vector<8x8x8xf32>, vector<8x8x8xf32> -> vector<8x8x8xf32>
    "tpu.trace_stop"() : () -> ()
    %61 = vector.shape_cast %60 : vector<8x8x8xf32> to vector<4x2x8x8xf32>
    %62 = vector.extract_strided_slice %61 {offsets = [0, 0, 0, 0], sizes = [1, 2, 8, 8], strides = [1, 1, 1, 1]} : vector<4x2x8x8xf32> to vector<1x2x8x8xf32>
    %63 = vector.shape_cast %62 : vector<1x2x8x8xf32> to vector<2x8x8xf32>
    %64 = vector.extract_strided_slice %61 {offsets = [1, 0, 0, 0], sizes = [1, 2, 8, 8], strides = [1, 1, 1, 1]} : vector<4x2x8x8xf32> to vector<1x2x8x8xf32>
    %65 = vector.shape_cast %64 : vector<1x2x8x8xf32> to vector<2x8x8xf32>
    %66 = vector.extract_strided_slice %61 {offsets = [2, 0, 0, 0], sizes = [1, 2, 8, 8], strides = [1, 1, 1, 1]} : vector<4x2x8x8xf32> to vector<1x2x8x8xf32>
    %67 = vector.shape_cast %66 : vector<1x2x8x8xf32> to vector<2x8x8xf32>
    %68 = vector.extract_strided_slice %61 {offsets = [3, 0, 0, 0], sizes = [1, 2, 8, 8], strides = [1, 1, 1, 1]} : vector<4x2x8x8xf32> to vector<1x2x8x8xf32>
    %69 = vector.shape_cast %68 : vector<1x2x8x8xf32> to vector<2x8x8xf32>
    %70 = tpu.concatenate %63, %65, %67, %69 in 2 : vector<2x8x8xf32>, vector<2x8x8xf32>, vector<2x8x8xf32>, vector<2x8x8xf32> -> vector<2x8x32xf32>
    %71 = arith.addf %0, %70 : vector<2x8x32xf32>
    %c0_27 = arith.constant 0 : index
    %c0_28 = arith.constant 0 : index
    %c0_29 = arith.constant 0 : index
    %72 = vector.load %arg9[%c0_27, %c0_28, %c0_29] : memref<2x8x32xf32, #tpu.memory_space<vmem>>, vector<2x8x32xf32>
    tpu.vector_store %arg9[%c0_27, %c0_28, %c0_29], %71 {strides = array<i32>} : memref<2x8x32xf32, #tpu.memory_space<vmem>>, vector<2x8x32xf32>,
    return
  }
  func.func @transform_0(%arg0: i32) -> (i32, i32, i32) {
    %c0_i32 = arith.constant 0 : i32
    %c0_i32_0 = arith.constant 0 : i32
    %c0_i32_1 = arith.constant 0 : i32
    return %arg0, %c0_i32, %c0_i32_0 : i32, i32, i32
  }
  func.func @transform_1(%arg0: i32) -> (i32, i32, i32) {
    %c0_i32 = arith.constant 0 : i32
    %c0_i32_0 = arith.constant 0 : i32
    %c0_i32_1 = arith.constant 0 : i32
    return %arg0, %c0_i32, %c0_i32_0 : i32, i32, i32
  }
  func.func @transform_2(%arg0: i32) -> (i32, i32) {
    %c0_i32 = arith.constant 0 : i32
    %c0_i32_0 = arith.constant 0 : i32
    %c0_i32_1 = arith.constant 0 : i32
    return %c0_i32, %c0_i32_0 : i32, i32
  }
  func.func @transform_3(%arg0: i32) -> (i32, i32) {
    %c0_i32 = arith.constant 0 : i32
    %c0_i32_0 = arith.constant 0 : i32
    %c0_i32_1 = arith.constant 0 : i32
    return %c0_i32, %c0_i32_0 : i32, i32
  }
  func.func @transform_4(%arg0: i32) -> (i32, i32) {
    %c0_i32 = arith.constant 0 : i32
    %c0_i32_0 = arith.constant 0 : i32
    %c0_i32_1 = arith.constant 0 : i32
    return %c0_i32, %c0_i32_0 : i32, i32
  }
  func.func @transform_5(%arg0: i32) -> (i32, i32) {
    %c0_i32 = arith.constant 0 : i32
    %c0_i32_0 = arith.constant 0 : i32
    %c0_i32_1 = arith.constant 0 : i32
    return %c0_i32, %c0_i32_0 : i32, i32
  }
  func.func @transform_6(%arg0: i32) -> (i32, i32) {
    %c0_i32 = arith.constant 0 : i32
    %c0_i32_0 = arith.constant 0 : i32
    %c0_i32_1 = arith.constant 0 : i32
    return %c0_i32, %c0_i32_0 : i32, i32
  }
  func.func @transform_7(%arg0: i32) -> (i32, i32) {
    %c0_i32 = arith.constant 0 : i32
    %c0_i32_0 = arith.constant 0 : i32
    %c0_i32_1 = arith.constant 0 : i32
    return %c0_i32, %c0_i32_0 : i32, i32
  }
  func.func @transform_8(%arg0: i32) -> (i32, i32, i32) {
    %c0_i32 = arith.constant 0 : i32
    %c0_i32_0 = arith.constant 0 : i32
    %c0_i32_1 = arith.constant 0 : i32
    return %arg0, %c0_i32, %c0_i32_0 : i32, i32, i32
  }
}

</mosaic_0001>

<llo_original>
// kernel: tpu_custom_call.1
$region0: #{tpu_custom_call.1}
  #allocation0 [shape = 'u32[]', space=smem, size = 0x4, offset = 0x4, fixed_abs, tag = 'smem constant byte address 0x4 - core index']
  #allocation1 [shape = 'u32[144,128]{1,0:T(1,128)}', space=vmem, size = 0x12000, scoped, tag = 'internal scratch']
  %s0 = inlined_call_operand.hbm [shape: f32[4,8,32], index: 0, kind: input, shape index: {}]
  %s1 = inlined_call_operand.hbm [shape: f32[4,1,8], index: 1, kind: input, shape index: {}]
  %s2 = inlined_call_operand.hbm [shape: f32[32,32], index: 2, kind: input, shape index: {}]
  %s3 = inlined_call_operand.vmem [shape: f32[1,32], index: 3, kind: input, shape index: {}]
  %s4 = inlined_call_operand.hbm [shape: f32[32,32], index: 4, kind: input, shape index: {}]
  %s5 = inlined_call_operand.vmem [shape: f32[1,32], index: 5, kind: input, shape index: {}]
  %s6 = inlined_call_operand.hbm [shape: f32[32,32], index: 6, kind: input, shape index: {}]
  %s7 = inlined_call_operand.vmem [shape: f32[1,32], index: 7, kind: input, shape index: {}]
  %s8 = inlined_call_operand.hbm [shape: f32[4,8,32], index: 8, kind: output, shape index: {}]
  %s9 = sld [smem:[#allocation0]]
  $region85: #{tpu_custom_call.1} parent=0
    _
  %s11 = ssub.s32 1, %s9
  %s12 = scalar_select 0, %s11, %s9
  $region1: #{tpu_custom_call.1} parent=0
    #allocation2 [shape = 'u8[16384]{0}', space=vmem, size = 0x4000, scoped, tag = 'input window, operand 0']
    #allocation3 [shape = 's32[2]{0}', space=sflag, size = 0x8, scoped, tag = 'scoped memory for tpu_custom_call.1']
    #allocation4 [shape = 's32[2]{0}', space=sflag, size = 0x8, scoped, tag = 'scoped memory for tpu_custom_call.1']
    #allocation5 [shape = 'u8[2048]{0}', space=vmem, size = 0x800, scoped, tag = 'input window, operand 1']
    #allocation6 [shape = 's32[2]{0}', space=sflag, size = 0x8, scoped, tag = 'scoped memory for tpu_custom_call.1']
    #allocation7 [shape = 'u8[16384]{0}', space=vmem, size = 0x4000, scoped, tag = 'input window, operand 2, single buffered']
    #allocation8 [shape = 'u8[16384]{0}', space=vmem, size = 0x4000, scoped, tag = 'input window, operand 4, single buffered']
    #allocation9 [shape = 's32[1]{0}', space=sflag, size = 0x4, scoped, tag = 'scoped memory for tpu_custom_call.1']
    #allocation10 [shape = 'u8[16384]{0}', space=vmem, size = 0x4000, scoped, tag = 'input window, operand 6, single buffered']
    #allocation11 [shape = 'u8[16384]{0}', space=vmem, size = 0x4000, scoped, tag = 'output window, operand 0']
    %13 = vsyncpa [#allocation3], 0
    %s14 = scalar_lea.sflag [#allocation3], 1
    %15 = vsyncpa %s14, 0
    %16 = vsyncpa [#allocation6], 0
    %s17 = scalar_lea.sflag [#allocation6], 1
    %18 = vsyncpa %s17, 0
    %19 = vsyncpa [#allocation9], 0
    %20 = vsyncpa [#allocation4], 0
    %s21 = scalar_lea.sflag [#allocation4], 1
    %22 = vsyncpa %s21, 0
    loop: start=0, step=1, limit=4
    $region2: #{tpu_custom_call.1} parent=1 // loop_pre_header
      _
    $region3: #{tpu_custom_call.1} parent=1 // loop_header
      %s24 = sphi 0, %s28
      %p25 = scmp.ge.s32.totalorder %s24, 4
      %s34 = sphi 0, %s36
      %s37 = sphi 0, %s34
      %s38 = sphi 0, %s37
      %s54 = sphi 0, %s38
      %s60 = sphi 0, %s62
      %s63 = sphi 0, %s60
      %s64 = sphi 0, %s63
      %s80 = sphi 0, %s64
      %s84 = sphi 0, %s84
      %s86 = sphi 0, %s84
      %s87 = sphi 0, %s86
      %s101 = sphi 0, %s87
      %s105 = sphi 0, %s105
      %s107 = sphi 0, %s105
      %s108 = sphi 0, %s107
      %s122 = sphi 0, %s108
      %s126 = sphi 0, %s126
      %s128 = sphi 0, %s126
      %s129 = sphi 0, %s128
      %s143 = sphi 0, %s129
      %s147 = sphi 0, %s147
      %s149 = sphi 0, %s147
      %s150 = sphi 0, %s149
      %s164 = sphi 0, %s150
      %s168 = sphi 0, %s168
      %s170 = sphi 0, %s168
      %s171 = sphi 0, %s170
      %s185 = sphi 0, %s171
      %s189 = sphi 0, %s189
      %s191 = sphi 0, %s189
      %s192 = sphi 0, %s191
      %s206 = sphi 0, %s192
      %s212 = sphi 0, %s214
      %s215 = sphi 0, %s212
      %s216 = sphi 0, %s215
      %s232 = sphi 0, %s216
    $region4: #{tpu_custom_call.1} parent=1 // loop_header_branch
      %27 = sbr.rel (%p25) target = $region8
    $region5: #{tpu_custom_call.1} parent=1 // loop_body
      %s29 = ssub.s32 %s24, 1
      %s30 = ssub.s32 %s24, 2
      %s31 = sadd.s32 %s24, 1
      %s32 = ssub.s32 %s24, %s31
      %p33 = scmp.eq.s32.totalorder %s32, 0
      %s35 = sadd.s32 %s34, 1
      %s36 = scalar_select %p33, %s34, %s35
      %p39 = pneg %p33
      %p40 = scmp.eq.s32.totalorder %s24, 1
      %p41 = por %p39, %p40
      %p42 = scmp.ne.s32.totalorder %s34, %s37
      %p43 = scmp.eq.s32.totalorder %s24, 0
      %p44 = por %p42, %p43
      %p45 = scmp.ne.s32.totalorder %s34, %s37
      %p46 = scmp.eq.s32.totalorder %s29, 1
      %p47 = por %p45, %p46
      %p48 = scmp.ne.s32.totalorder %s37, %s38
      %p49 = scmp.eq.s32.totalorder %s29, 0
      %p50 = por %p48, %p49
      %p51 = scmp.ne.s32.totalorder %s37, %s38
      %p52 = scmp.eq.s32.totalorder %s30, 1
      %p53 = por %p51, %p52
      %p55 = scmp.ne.s32.totalorder %s38, %s54
      %p56 = scmp.eq.s32.totalorder %s30, 0
      %p57 = por %p55, %p56
      %s58 = ssub.s32 %s24, %s31
      %p59 = scmp.eq.s32.totalorder %s58, 0
      %s61 = sadd.s32 %s60, 1
      %s62 = scalar_select %p59, %s60, %s61
      %p65 = pneg %p59
      %p66 = scmp.eq.s32.totalorder %s24, 1
      %p67 = por %p65, %p66
      %p68 = scmp.ne.s32.totalorder %s60, %s63
      %p69 = scmp.eq.s32.totalorder %s24, 0
      %p70 = por %p68, %p69
      %p71 = scmp.ne.s32.totalorder %s60, %s63
      %p72 = scmp.eq.s32.totalorder %s29, 1
      %p73 = por %p71, %p72
      %p74 = scmp.ne.s32.totalorder %s63, %s64
      %p75 = scmp.eq.s32.totalorder %s29, 0
      %p76 = por %p74, %p75
      %p77 = scmp.ne.s32.totalorder %s63, %s64
      %p78 = scmp.eq.s32.totalorder %s30, 1
      %p79 = por %p77, %p78
      %p81 = scmp.ne.s32.totalorder %s64, %s80
      %p82 = scmp.eq.s32.totalorder %s30, 0
      %p83 = por %p81, %p82
      %s85 = sadd.s32 %s84, 1
      %p88 = scmp.eq.s32.totalorder %s24, 1
      %p89 = scmp.ne.s32.totalorder %s84, %s86
      %p90 = scmp.eq.s32.totalorder %s24, 0
      %p91 = por %p89, %p90
      %p92 = scmp.ne.s32.totalorder %s84, %s86
      %p93 = scmp.eq.s32.totalorder %s29, 1
      %p94 = por %p92, %p93
      %p95 = scmp.ne.s32.totalorder %s86, %s87
      %p96 = scmp.eq.s32.totalorder %s29, 0
      %p97 = por %p95, %p96
      %p98 = scmp.ne.s32.totalorder %s86, %s87
      %p99 = scmp.eq.s32.totalorder %s30, 1
      %p100 = por %p98, %p99
      %p102 = scmp.ne.s32.totalorder %s87, %s101
      %p103 = scmp.eq.s32.totalorder %s30, 0
      %p104 = por %p102, %p103
      %s106 = sadd.s32 %s105, 1
      %p109 = scmp.eq.s32.totalorder %s24, 1
      %p110 = scmp.ne.s32.totalorder %s105, %s107
      %p111 = scmp.eq.s32.totalorder %s24, 0
      %p112 = por %p110, %p111
      %p113 = scmp.ne.s32.totalorder %s105, %s107
      %p114 = scmp.eq.s32.totalorder %s29, 1
      %p115 = por %p113, %p114
      %p116 = scmp.ne.s32.totalorder %s107, %s108
      %p117 = scmp.eq.s32.totalorder %s29, 0
      %p118 = por %p116, %p117
      %p119 = scmp.ne.s32.totalorder %s107, %s108
      %p120 = scmp.eq.s32.totalorder %s30, 1
      %p121 = por %p119, %p120
      %p123 = scmp.ne.s32.totalorder %s108, %s122
      %p124 = scmp.eq.s32.totalorder %s30, 0
      %p125 = por %p123, %p124
      %s127 = sadd.s32 %s126, 1
      %p130 = scmp.eq.s32.totalorder %s24, 1
      %p131 = scmp.ne.s32.totalorder %s126, %s128
      %p132 = scmp.eq.s32.totalorder %s24, 0
      %p133 = por %p131, %p132
      %p134 = scmp.ne.s32.totalorder %s126, %s128
      %p135 = scmp.eq.s32.totalorder %s29, 1
      %p136 = por %p134, %p135
      %p137 = scmp.ne.s32.totalorder %s128, %s129
      %p138 = scmp.eq.s32.totalorder %s29, 0
      %p139 = por %p137, %p138
      %p140 = scmp.ne.s32.totalorder %s128, %s129
      %p141 = scmp.eq.s32.totalorder %s30, 1
      %p142 = por %p140, %p141
      %p144 = scmp.ne.s32.totalorder %s129, %s143
      %p145 = scmp.eq.s32.totalorder %s30, 0
      %p146 = por %p144, %p145
      %s148 = sadd.s32 %s147, 1
      %p151 = scmp.eq.s32.totalorder %s24, 1
      %p152 = scmp.ne.s32.totalorder %s147, %s149
      %p153 = scmp.eq.s32.totalorder %s24, 0
      %p154 = por %p152, %p153
      %p155 = scmp.ne.s32.totalorder %s147, %s149
      %p156 = scmp.eq.s32.totalorder %s29, 1
      %p157 = por %p155, %p156
      %p158 = scmp.ne.s32.totalorder %s149, %s150
      %p159 = scmp.eq.s32.totalorder %s29, 0
      %p160 = por %p158, %p159
      %p161 = scmp.ne.s32.totalorder %s149, %s150
      %p162 = scmp.eq.s32.totalorder %s30, 1
      %p163 = por %p161, %p162
      %p165 = scmp.ne.s32.totalorder %s150, %s164
      %p166 = scmp.eq.s32.totalorder %s30, 0
      %p167 = por %p165, %p166
      %s169 = sadd.s32 %s168, 1
      %p172 = scmp.eq.s32.totalorder %s24, 1
      %p173 = scmp.ne.s32.totalorder %s168, %s170
      %p174 = scmp.eq.s32.totalorder %s24, 0
      %p175 = por %p173, %p174
      %p176 = scmp.ne.s32.totalorder %s168, %s170
      %p177 = scmp.eq.s32.totalorder %s29, 1
      %p178 = por %p176, %p177
      %p179 = scmp.ne.s32.totalorder %s170, %s171
      %p180 = scmp.eq.s32.totalorder %s29, 0
      %p181 = por %p179, %p180
      %p182 = scmp.ne.s32.totalorder %s170, %s171
      %p183 = scmp.eq.s32.totalorder %s30, 1
      %p184 = por %p182, %p183
      %p186 = scmp.ne.s32.totalorder %s171, %s185
      %p187 = scmp.eq.s32.totalorder %s30, 0
      %p188 = por %p186, %p187
      %s190 = sadd.s32 %s189, 1
      %p193 = scmp.eq.s32.totalorder %s24, 1
      %p194 = scmp.ne.s32.totalorder %s189, %s191
      %p195 = scmp.eq.s32.totalorder %s24, 0
      %p196 = por %p194, %p195
      %p197 = scmp.ne.s32.totalorder %s189, %s191
      %p198 = scmp.eq.s32.totalorder %s29, 1
      %p199 = por %p197, %p198
      %p200 = scmp.ne.s32.totalorder %s191, %s192
      %p201 = scmp.eq.s32.totalorder %s29, 0
      %p202 = por %p200, %p201
      %p203 = scmp.ne.s32.totalorder %s191, %s192
      %p204 = scmp.eq.s32.totalorder %s30, 1
      %p205 = por %p203, %p204
      %p207 = scmp.ne.s32.totalorder %s192, %s206
      %p208 = scmp.eq.s32.totalorder %s30, 0
      %p209 = por %p207, %p208
      %s210 = ssub.s32 %s24, %s31
      %p211 = scmp.eq.s32.totalorder %s210, 0
      %s213 = sadd.s32 %s212, 1
      %s214 = scalar_select %p211, %s212, %s213
      %p217 = pneg %p211
      %p218 = scmp.eq.s32.totalorder %s24, 1
      %p219 = por %p217, %p218
      %p220 = scmp.ne.s32.totalorder %s212, %s215
      %p221 = scmp.eq.s32.totalorder %s24, 0
      %p222 = por %p220, %p221
      %p223 = scmp.ne.s32.totalorder %s212, %s215
      %p224 = scmp.eq.s32.totalorder %s29, 1
      %p225 = por %p223, %p224
      %p226 = scmp.ne.s32.totalorder %s215, %s216
      %p227 = scmp.eq.s32.totalorder %s29, 0
      %p228 = por %p226, %p227
      %p229 = scmp.ne.s32.totalorder %s215, %s216
      %p230 = scmp.eq.s32.totalorder %s30, 1
      %p231 = por %p229, %p230
      %p233 = scmp.ne.s32.totalorder %s216, %s232
      %p234 = scmp.eq.s32.totalorder %s30, 0
      %p235 = por %p233, %p234
      %p236 = scmp.le.s32.totalorder 1, %s24
      %p237 = scmp.lt.s32.totalorder %s24, 3
      %p238 = pnand %p236, %p237
      %p239 = pneg %p238
      // Predicated region
      $region9: #{tpu_custom_call.1} parent=5 // pred_check
        _
      $region10: #{tpu_custom_call.1} parent=5 // pred_check_branch
        %241 = sbr.rel (%p238) target = $region12
      $region11: #{tpu_custom_call.1} parent=5 // pred_region
        %s242 = ssub.s32 %s24, 1
        // Predicated region
        $region13: #{tpu_custom_call.1} parent=11 // pred_check
          %p243 = pneg %p97
        $region14: #{tpu_custom_call.1} parent=11 // pred_check_branch
          %245 = sbr.rel (%p243) target = $region16
        $region15: #{tpu_custom_call.1} parent=11 // pred_region
          %s247 = ssub.s32 512, 512
          %248 = vsyncadd [#allocation6], %s247
          %s249 = sshll.u32 [#allocation7], 4
          %s250 = int_to_ptr.vmem [resolvable:$true] %s249
          %255 = dma.hbm_to_vmem [thread:$0]  %s2, 512, %s250, [#allocation6], 128, 128, 8
        $region16: #{tpu_custom_call.1} parent=11 // pred_fallthru
          _
        // Predicated region
        $region17: #{tpu_custom_call.1} parent=11 // pred_check
          %p256 = pneg %p118
        $region18: #{tpu_custom_call.1} parent=11 // pred_check_branch
          %258 = sbr.rel (%p256) target = $region20
        $region19: #{tpu_custom_call.1} parent=11 // pred_region
          _
        $region20: #{tpu_custom_call.1} parent=11 // pred_fallthru
          _
        // Predicated region
        $region21: #{tpu_custom_call.1} parent=11 // pred_check
          %p259 = pneg %p139
        $region22: #{tpu_custom_call.1} parent=11 // pred_check_branch
          %261 = sbr.rel (%p259) target = $region24
        $region23: #{tpu_custom_call.1} parent=11 // pred_region
          %s263 = ssub.s32 512, 512
          %264 = vsyncadd [#allocation9], %s263
          %s265 = sshll.u32 [#allocation8], 4
          %s266 = int_to_ptr.vmem [resolvable:$true] %s265
          %271 = dma.hbm_to_vmem [thread:$0]  %s4, 512, %s266, [#allocation9], 128, 128, 8
        $region24: #{tpu_custom_call.1} parent=11 // pred_fallthru
          _
        // Predicated region
        $region25: #{tpu_custom_call.1} parent=11 // pred_check
          %p272 = pneg %p160
        $region26: #{tpu_custom_call.1} parent=11 // pred_check_branch
          %274 = sbr.rel (%p272) target = $region28
        $region27: #{tpu_custom_call.1} parent=11 // pred_region
          _
        $region28: #{tpu_custom_call.1} parent=11 // pred_fallthru
          _
        // Predicated region
        $region29: #{tpu_custom_call.1} parent=11 // pred_check
          %p275 = pneg %p181
        $region30: #{tpu_custom_call.1} parent=11 // pred_check_branch
          %277 = sbr.rel (%p275) target = $region32
        $region31: #{tpu_custom_call.1} parent=11 // pred_region
          %s279 = ssub.s32 512, 512
          %280 = vsyncadd [#allocation9], %s279
          %s281 = sshll.u32 [#allocation10], 4
          %s282 = int_to_ptr.vmem [resolvable:$true] %s281
          %287 = dma.hbm_to_vmem [thread:$0]  %s6, 512, %s282, [#allocation9], 128, 128, 8
        $region32: #{tpu_custom_call.1} parent=11 // pred_fallthru
          _
        // Predicated region
        $region33: #{tpu_custom_call.1} parent=11 // pred_check
          %p288 = pneg %p202
        $region34: #{tpu_custom_call.1} parent=11 // pred_check_branch
          %290 = sbr.rel (%p288) target = $region36
        $region35: #{tpu_custom_call.1} parent=11 // pred_region
          _
        $region36: #{tpu_custom_call.1} parent=11 // pred_fallthru
          _
      $region12: #{tpu_custom_call.1} parent=5 // pred_fallthru
        _
      %p291 = scmp.lt.s32.totalorder %s24, 2
      // Predicated region
      $region37: #{tpu_custom_call.1} parent=5 // pred_check
        %p292 = pneg %p291
      $region38: #{tpu_custom_call.1} parent=5 // pred_check_branch
        %294 = sbr.rel (%p292) target = $region40
      $region39: #{tpu_custom_call.1} parent=5 // pred_region
        // Predicated region
        $region41: #{tpu_custom_call.1} parent=39 // pred_check
          %p295 = pneg %p44
        $region42: #{tpu_custom_call.1} parent=39 // pred_check_branch
          %297 = sbr.rel (%p295) target = $region44
        $region43: #{tpu_custom_call.1} parent=39 // pred_region
          %s298 = sand.u32 %s34, 1
          %s299 = scalar_lea.sflag [#allocation3], %s298
          %s300 = sand.u32 %s34, 1
          %s301 = smul.addr %s300, 16
          %s302 = scalar_lea.vmem [#allocation2], %s301
          %s303 = smul.u32 2, %s24
          %s305 = ssub.s32 256, 256
          %306 = vsyncadd %s299, %s305
          %s307 = smul.addr %s303, 128
          %s308 = scalar_lea.hbm %s0, %s307
          %s309 = sshll.u32 %s302, 4
          %s310 = int_to_ptr.vmem [resolvable:$true] %s309
          %315 = dma.hbm_to_vmem [thread:$0]  %s308, 256, %s310, %s299, 128, 128, 8
        $region44: #{tpu_custom_call.1} parent=39 // pred_fallthru
          _
        // Predicated region
        $region45: #{tpu_custom_call.1} parent=39 // pred_check
          %p316 = pneg %p70
        $region46: #{tpu_custom_call.1} parent=39 // pred_check_branch
          %318 = sbr.rel (%p316) target = $region48
        $region47: #{tpu_custom_call.1} parent=39 // pred_region
          %s319 = sand.u32 %s24, 1
          %s320 = scalar_lea.sflag [#allocation6], %s319
          %s321 = sand.u32 %s60, 1
          %s322 = smul.addr %s321, 2
          %s323 = scalar_lea.vmem [#allocation5], %s322
          %s324 = smul.u32 2, %s24
          %s326 = ssub.s32 32, 32
          %327 = vsyncadd %s320, %s326
          %s328 = smul.addr %s324, 16
          %s329 = scalar_lea.hbm %s1, %s328
          %s330 = sshll.u32 %s323, 4
          %s331 = int_to_ptr.vmem [resolvable:$true] %s330
          %336 = dma.hbm_to_vmem [thread:$0]  %s329, 32, %s331, %s320, 16, 16, 1
        $region48: #{tpu_custom_call.1} parent=39 // pred_fallthru
          _
      $region40: #{tpu_custom_call.1} parent=5 // pred_fallthru
        _
      %p337 = scmp.le.s32.totalorder 1, %s24
      %p338 = scmp.lt.s32.totalorder %s24, 3
      %p339 = pnand %p337, %p338
      %p340 = pneg %p339
      // Predicated region
      $region49: #{tpu_custom_call.1} parent=5 // pred_check
        _
      $region50: #{tpu_custom_call.1} parent=5 // pred_check_branch
        %342 = sbr.rel (%p339) target = $region52
      $region51: #{tpu_custom_call.1} parent=5 // pred_region
        %s343 = ssub.s32 %s24, 1
        %s344 = sand.u32 %s37, 1
        %s345 = scalar_lea.sflag [#allocation3], %s344
        %s346 = sand.u32 %s37, 1
        %s347 = smul.addr %s346, 16
        %s348 = scalar_lea.vmem [#allocation2], %s347
        // Predicated region
        $region53: #{tpu_custom_call.1} parent=51 // pred_check
          %p349 = pneg %p50
        $region54: #{tpu_custom_call.1} parent=51 // pred_check_branch
          %351 = sbr.rel (%p349) target = $region56
        $region55: #{tpu_custom_call.1} parent=51 // pred_region
          %352 = dma.done %s345, 256
        $region56: #{tpu_custom_call.1} parent=51 // pred_fallthru
          _
        %s353 = sand.u32 %s29, 1
        %s354 = scalar_lea.sflag [#allocation6], %s353
        %s355 = sand.u32 %s63, 1
        %s356 = smul.addr %s355, 2
        %s357 = scalar_lea.vmem [#allocation5], %s356
        // Predicated region
        $region57: #{tpu_custom_call.1} parent=51 // pred_check
          %p358 = pneg %p76
        $region58: #{tpu_custom_call.1} parent=51 // pred_check_branch
          %360 = sbr.rel (%p358) target = $region60
        $region59: #{tpu_custom_call.1} parent=51 // pred_region
          %361 = dma.done %s354, 32
        $region60: #{tpu_custom_call.1} parent=51 // pred_fallthru
          _
        // Predicated region
        $region61: #{tpu_custom_call.1} parent=51 // pred_check
          %p362 = pneg %p97
        $region62: #{tpu_custom_call.1} parent=51 // pred_check_branch
          %364 = sbr.rel (%p362) target = $region64
        $region63: #{tpu_custom_call.1} parent=51 // pred_region
          %365 = dma.done [#allocation6], 512
        $region64: #{tpu_custom_call.1} parent=51 // pred_fallthru
          _
        // Predicated region
        $region65: #{tpu_custom_call.1} parent=51 // pred_check
          %p366 = pneg %p139
        $region66: #{tpu_custom_call.1} parent=51 // pred_check_branch
          %368 = sbr.rel (%p366) target = $region68
        $region67: #{tpu_custom_call.1} parent=51 // pred_region
          %369 = dma.done [#allocation9], 512
        $region68: #{tpu_custom_call.1} parent=51 // pred_fallthru
          _
        // Predicated region
        $region69: #{tpu_custom_call.1} parent=51 // pred_check
          %p370 = pneg %p181
        $region70: #{tpu_custom_call.1} parent=51 // pred_check_branch
          %372 = sbr.rel (%p370) target = $region72
        $region71: #{tpu_custom_call.1} parent=51 // pred_region
          %373 = dma.done [#allocation9], 512
        $region72: #{tpu_custom_call.1} parent=51 // pred_fallthru
          _
        %s374 = sand.u32 %s37, 1
        %s375 = scalar_lea.sflag [#allocation3], %s374
        %s376 = sand.u32 %s37, 1
        %s377 = smul.addr %s376, 16
        %s378 = scalar_lea.vmem [#allocation2], %s377
        %p379 = pneg %p50
        %p380 = pneg %p47
        %s381 = sand.u32 %s29, 1
        %s382 = scalar_lea.sflag [#allocation6], %s381
        %s383 = sand.u32 %s63, 1
        %s384 = smul.addr %s383, 2
        %s385 = scalar_lea.vmem [#allocation5], %s384
        %p386 = pneg %p76
        %p387 = pneg %p73
        %p388 = pneg %p97
        %p389 = pneg %p94
        %p390 = pneg %p118
        %p391 = pneg %p115
        %p392 = pneg %p139
        %p393 = pneg %p136
        %p394 = pneg %p160
        %p395 = pneg %p157
        %p396 = pneg %p181
        %p397 = pneg %p178
        %p398 = pneg %p202
        %p399 = pneg %p199
        %p400 = pneg %p228
        %p401 = pneg %p225
        %s402 = sand.u32 %s215, 1
        %s403 = scalar_lea.sflag [#allocation4], %s402
        %s404 = sand.u32 %s215, 1
        %s405 = smul.addr %s404, 16
        %s406 = scalar_lea.vmem [#allocation11], %s405
        %s407 = smul.u32 2, %s29
        %s408 = smul.u32 2, %s29
        %s409 = smul.u32 2, %s29
        %v410 = vld [vmem:[%s348] sm:$0xff]
        %v411 = vld [vmem:[%s348 + $0x8] sm:$0xff]
        %v412 = vld [vmem:[#allocation7] sm:$0xff]
        %v413 = vld [vmem:[#allocation7 + $0x8] sm:$0xff]
        %v414 = vld [vmem:[#allocation7 + $0x10] sm:$0xff]
        %v415 = vld [vmem:[#allocation7 + $0x18] sm:$0xff]
        %v416 = vld [vmem:[%s3] sm:$0x1]
        %v418 = vlaneseq
        %v419 = vshrl.u32 %v418, 7
        %v420 = vsub.s32 0, %v419
        %v421 = vrot.slane %v416, %v420
        %vm423 = vcmask 261120
        %v425 = vsel %vm423, %v410, 0
        %v428 = vsel %vm423, %v411, 0
        %430 = vmatprep.subr.mxu0 0.0
        %431 = vmatpush1.msra.mxu0 0.0
        %432 = vmatprep.subr.mxu0 0.0
        %433 = vmatpush1.msra.mxu0 0.0
        %434 = vmatprep.subr.mxu0 0.0
        %435 = vmatpush1.msra.mxu0 0.0
        %436 = vmatprep.subr.mxu0 0.0
        %437 = vmatpush1.msra.mxu0 0.0
        %438 = vmatprep.subr.mxu0 0.0
        %439 = vmatpush1.msra.mxu0 0.0
        %440 = vmatprep.subr.mxu0 0.0
        %441 = vmatpush1.msra.mxu0 0.0
        %442 = vmatprep.subr.mxu0 0.0
        %443 = vmatpush1.msra.mxu0 0.0
        %444 = vmatprep.subr.mxu0 0.0
        %445 = vmatpush1.msra.mxu0 0.0
        %446 = vmatprep.subr.mxu0 0.0
        %447 = vmatpush1.msra.mxu0 0.0
        %448 = vmatprep.subr.mxu0 0.0
        %449 = vmatpush1.msra.mxu0 0.0
        %450 = vmatprep.subr.mxu0 0.0
        %451 = vmatpush1.msra.mxu0 0.0
        %452 = vmatprep.subr.mxu0 0.0
        %453 = vmatpush1.msra.mxu0 0.0
        %454 = vmatprep.subr.mxu0 0.0
        %455 = vmatpush1.msra.mxu0 %v415
        %456 = vmatprep.subr.mxu0 0.0
        %457 = vmatpush1.msra.mxu0 %v414
        %458 = vmatprep.subr.mxu0 0.0
        %459 = vmatpush1.msra.mxu0 %v413
        %460 = vmatprep.subr.mxu0 0.0
        %461 = vmatpush1.msra.mxu0 %v412
        %462 = vmatprep.subr.mxu0 0.0
        %463 = vmatpush2.msra.mxu0 0.0
        %464 = vmatprep.subr.mxu0 0.0
        %465 = vmatpush2.msra.mxu0 0.0
        %466 = vmatprep.subr.mxu0 0.0
        %467 = vmatpush2.msra.mxu0 0.0
        %468 = vmatprep.subr.mxu0 0.0
        %469 = vmatpush2.msra.mxu0 0.0
        %470 = vmatprep.subr.mxu0 0.0
        %471 = vmatpush2.msra.mxu0 0.0
        %472 = vmatprep.subr.mxu0 0.0
        %473 = vmatpush2.msra.mxu0 0.0
        %474 = vmatprep.subr.mxu0 0.0
        %475 = vmatpush2.msra.mxu0 0.0
        %476 = vmatprep.subr.mxu0 0.0
        %477 = vmatpush2.msra.mxu0 0.0
        %478 = vmatprep.subr.mxu0 0.0
        %479 = vmatpush2.msra.mxu0 0.0
        %480 = vmatprep.subr.mxu0 0.0
        %481 = vmatpush2.msra.mxu0 0.0
        %482 = vmatprep.subr.mxu0 0.0
        %483 = vmatpush2.msra.mxu0 0.0
        %484 = vmatprep.subr.mxu0 0.0
        %485 = vmatpush2.msra.mxu0 0.0
        %486 = vmatprep.subr.mxu0 0.0
        %487 = vmatpush2.msra.mxu0 0.0
        %488 = vmatprep.subr.mxu0 0.0
        %489 = vmatpush2.msra.mxu0 0.0
        %490 = vmatprep.subr.mxu0 0.0
        %491 = vmatpush2.msra.mxu0 0.0
        %492 = vmatprep.subr.mxu0 0.0
        %493 = vmatpush2.msra.mxu0 0.0
        %494 = vmatprep.mubr.f32.mxu0 0.0
        %495 = vmatmul.mubr.f32.gmra.mxu0 %v425
        %v496 = vpop.f32.mrf.mxu0
        %v497 = vadd.f32 %v421, %v496
        %v498 = vpop.f32.mrf.mxu0
        %499 = vmatprep.mubr.f32.mxu0 0.0
        %500 = vmatmul.mubr.f32.gmra.mxu0 %v428
        %v501 = vpop.f32.mrf.mxu0
        %v502 = vadd.f32 %v421, %v501
        %v503 = vpop.f32.mrf.mxu0
        %504 = vdwg.mxu0
        %v505 = vld [vmem:[#allocation8] sm:$0xff]
        %v506 = vld [vmem:[#allocation8 + $0x8] sm:$0xff]
        %v507 = vld [vmem:[#allocation8 + $0x10] sm:$0xff]
        %v508 = vld [vmem:[#allocation8 + $0x18] sm:$0xff]
        %v509 = vld [vmem:[%s5] sm:$0x1]
        %v511 = vlaneseq
        %v512 = vshrl.u32 %v511, 7
        %v513 = vsub.s32 0, %v512
        %v514 = vrot.slane %v509, %v513
        %516 = vmatprep.subr.mxu0 0.0
        %517 = vmatpush1.msra.mxu0 0.0
        %518 = vmatprep.subr.mxu0 0.0
        %519 = vmatpush1.msra.mxu0 0.0
        %520 = vmatprep.subr.mxu0 0.0
        %521 = vmatpush1.msra.mxu0 0.0
        %522 = vmatprep.subr.mxu0 0.0
        %523 = vmatpush1.msra.mxu0 0.0
        %524 = vmatprep.subr.mxu0 0.0
        %525 = vmatpush1.msra.mxu0 0.0
        %526 = vmatprep.subr.mxu0 0.0
        %527 = vmatpush1.msra.mxu0 0.0
        %528 = vmatprep.subr.mxu0 0.0
        %529 = vmatpush1.msra.mxu0 0.0
        %530 = vmatprep.subr.mxu0 0.0
        %531 = vmatpush1.msra.mxu0 0.0
        %532 = vmatprep.subr.mxu0 0.0
        %533 = vmatpush1.msra.mxu0 0.0
        %534 = vmatprep.subr.mxu0 0.0
        %535 = vmatpush1.msra.mxu0 0.0
        %536 = vmatprep.subr.mxu0 0.0
        %537 = vmatpush1.msra.mxu0 0.0
        %538 = vmatprep.subr.mxu0 0.0
        %539 = vmatpush1.msra.mxu0 0.0
        %540 = vmatprep.subr.mxu0 0.0
        %541 = vmatpush1.msra.mxu0 %v508
        %542 = vmatprep.subr.mxu0 0.0
        %543 = vmatpush1.msra.mxu0 %v507
        %544 = vmatprep.subr.mxu0 0.0
        %545 = vmatpush1.msra.mxu0 %v506
        %546 = vmatprep.subr.mxu0 0.0
        %547 = vmatpush1.msra.mxu0 %v505
        %548 = vmatprep.subr.mxu0 0.0
        %549 = vmatpush2.msra.mxu0 0.0
        %550 = vmatprep.subr.mxu0 0.0
        %551 = vmatpush2.msra.mxu0 0.0
        %552 = vmatprep.subr.mxu0 0.0
        %553 = vmatpush2.msra.mxu0 0.0
        %554 = vmatprep.subr.mxu0 0.0
        %555 = vmatpush2.msra.mxu0 0.0
        %556 = vmatprep.subr.mxu0 0.0
        %557 = vmatpush2.msra.mxu0 0.0
        %558 = vmatprep.subr.mxu0 0.0
        %559 = vmatpush2.msra.mxu0 0.0
        %560 = vmatprep.subr.mxu0 0.0
        %561 = vmatpush2.msra.mxu0 0.0
        %562 = vmatprep.subr.mxu0 0.0
        %563 = vmatpush2.msra.mxu0 0.0
        %564 = vmatprep.subr.mxu0 0.0
        %565 = vmatpush2.msra.mxu0 0.0
        %566 = vmatprep.subr.mxu0 0.0
        %567 = vmatpush2.msra.mxu0 0.0
        %568 = vmatprep.subr.mxu0 0.0
        %569 = vmatpush2.msra.mxu0 0.0
        %570 = vmatprep.subr.mxu0 0.0
        %571 = vmatpush2.msra.mxu0 0.0
        %572 = vmatprep.subr.mxu0 0.0
        %573 = vmatpush2.msra.mxu0 0.0
        %574 = vmatprep.subr.mxu0 0.0
        %575 = vmatpush2.msra.mxu0 0.0
        %576 = vmatprep.subr.mxu0 0.0
        %577 = vmatpush2.msra.mxu0 0.0
        %578 = vmatprep.subr.mxu0 0.0
        %579 = vmatpush2.msra.mxu0 0.0
        %580 = vmatprep.mubr.f32.mxu0 0.0
        %581 = vmatmul.mubr.f32.gmra.mxu0 %v425
        %v582 = vpop.f32.mrf.mxu0
        %v583 = vadd.f32 %v514, %v582
        %v584 = vpop.f32.mrf.mxu0
        %585 = vmatprep.mubr.f32.mxu0 0.0
        %586 = vmatmul.mubr.f32.gmra.mxu0 %v428
        %v587 = vpop.f32.mrf.mxu0
        %v588 = vadd.f32 %v514, %v587
        %v589 = vpop.f32.mrf.mxu0
        %590 = vdwg.mxu0
        %v591 = vld [vmem:[#allocation10] sm:$0xff]
        %v592 = vld [vmem:[#allocation10 + $0x8] sm:$0xff]
        %v593 = vld [vmem:[#allocation10 + $0x10] sm:$0xff]
        %v594 = vld [vmem:[#allocation10 + $0x18] sm:$0xff]
        %v595 = vld [vmem:[%s7] sm:$0x1]
        %v597 = vlaneseq
        %v598 = vshrl.u32 %v597, 7
        %v599 = vsub.s32 0, %v598
        %v600 = vrot.slane %v595, %v599
        %602 = vmatprep.subr.mxu0 0.0
        %603 = vmatpush1.msra.mxu0 0.0
        %604 = vmatprep.subr.mxu0 0.0
        %605 = vmatpush1.msra.mxu0 0.0
        %606 = vmatprep.subr.mxu0 0.0
        %607 = vmatpush1.msra.mxu0 0.0
        %608 = vmatprep.subr.mxu0 0.0
        %609 = vmatpush1.msra.mxu0 0.0
        %610 = vmatprep.subr.mxu0 0.0
        %611 = vmatpush1.msra.mxu0 0.0
        %612 = vmatprep.subr.mxu0 0.0
        %613 = vmatpush1.msra.mxu0 0.0
        %614 = vmatprep.subr.mxu0 0.0
        %615 = vmatpush1.msra.mxu0 0.0
        %616 = vmatprep.subr.mxu0 0.0
        %617 = vmatpush1.msra.mxu0 0.0
        %618 = vmatprep.subr.mxu0 0.0
        %619 = vmatpush1.msra.mxu0 0.0
        %620 = vmatprep.subr.mxu0 0.0
        %621 = vmatpush1.msra.mxu0 0.0
        %622 = vmatprep.subr.mxu0 0.0
        %623 = vmatpush1.msra.mxu0 0.0
        %624 = vmatprep.subr.mxu0 0.0
        %625 = vmatpush1.msra.mxu0 0.0
        %626 = vmatprep.subr.mxu0 0.0
        %627 = vmatpush1.msra.mxu0 %v594
        %628 = vmatprep.subr.mxu0 0.0
        %629 = vmatpush1.msra.mxu0 %v593
        %630 = vmatprep.subr.mxu0 0.0
        %631 = vmatpush1.msra.mxu0 %v592
        %632 = vmatprep.subr.mxu0 0.0
        %633 = vmatpush1.msra.mxu0 %v591
        %634 = vmatprep.subr.mxu0 0.0
        %635 = vmatpush2.msra.mxu0 0.0
        %636 = vmatprep.subr.mxu0 0.0
        %637 = vmatpush2.msra.mxu0 0.0
        %638 = vmatprep.subr.mxu0 0.0
        %639 = vmatpush2.msra.mxu0 0.0
        %640 = vmatprep.subr.mxu0 0.0
        %641 = vmatpush2.msra.mxu0 0.0
        %642 = vmatprep.subr.mxu0 0.0
        %643 = vmatpush2.msra.mxu0 0.0
        %644 = vmatprep.subr.mxu0 0.0
        %645 = vmatpush2.msra.mxu0 0.0
        %646 = vmatprep.subr.mxu0 0.0
        %647 = vmatpush2.msra.mxu0 0.0
        %648 = vmatprep.subr.mxu0 0.0
        %649 = vmatpush2.msra.mxu0 0.0
        %650 = vmatprep.subr.mxu0 0.0
        %651 = vmatpush2.msra.mxu0 0.0
        %652 = vmatprep.subr.mxu0 0.0
        %653 = vmatpush2.msra.mxu0 0.0
        %654 = vmatprep.subr.mxu0 0.0
        %655 = vmatpush2.msra.mxu0 0.0
        %656 = vmatprep.subr.mxu0 0.0
        %657 = vmatpush2.msra.mxu0 0.0
        %658 = vmatprep.subr.mxu0 0.0
        %659 = vmatpush2.msra.mxu0 0.0
        %660 = vmatprep.subr.mxu0 0.0
        %661 = vmatpush2.msra.mxu0 0.0
        %662 = vmatprep.subr.mxu0 0.0
        %663 = vmatpush2.msra.mxu0 0.0
        %664 = vmatprep.subr.mxu0 0.0
        %665 = vmatpush2.msra.mxu0 0.0
        %666 = vmatprep.mubr.f32.mxu0 0.0
        %667 = vmatmul.mubr.f32.gmra.mxu0 %v425
        %v668 = vpop.f32.mrf.mxu0
        %v669 = vadd.f32 %v600, %v668
        %v670 = vpop.f32.mrf.mxu0
        %671 = vmatprep.mubr.f32.mxu0 0.0
        %672 = vmatmul.mubr.f32.gmra.mxu0 %v428
        %v673 = vpop.f32.mrf.mxu0
        %v674 = vadd.f32 %v600, %v673
        %v675 = vpop.f32.mrf.mxu0
        %676 = vdwg.mxu0
        %679 = vrot.lane.b32.xlu0 %v497, 120
        %v680 = vpop.permute.xlu0 %679
        %681 = vrot.lane.b32.xlu0 %v502, 120
        %v682 = vpop.permute.xlu0 %681
        %683 = vrot.lane.b32.xlu0 %v497, 112
        %v684 = vpop.permute.xlu0 %683
        %685 = vrot.lane.b32.xlu0 %v502, 112
        %v686 = vpop.permute.xlu0 %685
        %687 = vrot.lane.b32.xlu0 %v497, 104
        %v688 = vpop.permute.xlu0 %687
        %689 = vrot.lane.b32.xlu0 %v502, 104
        %v690 = vpop.permute.xlu0 %689
        %693 = vrot.lane.b32.xlu0 %v583, 120
        %v694 = vpop.permute.xlu0 %693
        %695 = vrot.lane.b32.xlu0 %v588, 120
        %v696 = vpop.permute.xlu0 %695
        %697 = vrot.lane.b32.xlu0 %v583, 112
        %v698 = vpop.permute.xlu0 %697
        %699 = vrot.lane.b32.xlu0 %v588, 112
        %v700 = vpop.permute.xlu0 %699
        %701 = vrot.lane.b32.xlu0 %v583, 104
        %v702 = vpop.permute.xlu0 %701
        %703 = vrot.lane.b32.xlu0 %v588, 104
        %v704 = vpop.permute.xlu0 %703
        %707 = vrot.lane.b32.xlu0 %v669, 120
        %v708 = vpop.permute.xlu0 %707
        %709 = vrot.lane.b32.xlu0 %v674, 120
        %v710 = vpop.permute.xlu0 %709
        %713 = vrot.lane.b32.xlu0 %v669, 112
        %v714 = vpop.permute.xlu0 %713
        %715 = vrot.lane.b32.xlu0 %v674, 112
        %v716 = vpop.permute.xlu0 %715
        %719 = vrot.lane.b32.xlu0 %v669, 104
        %v720 = vpop.permute.xlu0 %719
        %721 = vrot.lane.b32.xlu0 %v674, 104
        %v722 = vpop.permute.xlu0 %721
        %v725 = vld [vmem:[%s357] sm:$0x1]
        %v726 = vld [vmem:[%s357 + $0x1] sm:$0x1]
        %vm727 = vcmp.eq.f32.partialorder %v725, 0.0
        %vm728 = vcmp.eq.f32.partialorder %v726, 0.0
        %v729 = vsel %vm727, -1e+09, 0.0
        %v730 = vsel %vm728, -1e+09, 0.0
        %vm731 = vcmask 64512
        %v732 = vsel %vm731, %v497, 0
        %v734 = vsel %vm731, %v583, 0
        %736 = vmatprep.subr.mxu0 0.0
        %737 = vmatpush1.xpose.msra.mxu0 0.0
        %738 = vmatprep.subr.mxu0 0.0
        %739 = vmatpush1.xpose.msra.mxu0 0.0
        %740 = vmatprep.subr.mxu0 0.0
        %741 = vmatpush1.xpose.msra.mxu0 0.0
        %742 = vmatprep.subr.mxu0 0.0
        %743 = vmatpush1.xpose.msra.mxu0 0.0
        %744 = vmatprep.subr.mxu0 0.0
        %745 = vmatpush1.xpose.msra.mxu0 0.0
        %746 = vmatprep.subr.mxu0 0.0
        %747 = vmatpush1.xpose.msra.mxu0 0.0
        %748 = vmatprep.subr.mxu0 0.0
        %749 = vmatpush1.xpose.msra.mxu0 0.0
        %750 = vmatprep.subr.mxu0 0.0
        %751 = vmatpush1.xpose.msra.mxu0 0.0
        %752 = vmatprep.subr.mxu0 0.0
        %753 = vmatpush1.xpose.msra.mxu0 0.0
        %754 = vmatprep.subr.mxu0 0.0
        %755 = vmatpush1.xpose.msra.mxu0 0.0
        %756 = vmatprep.subr.mxu0 0.0
        %757 = vmatpush1.xpose.msra.mxu0 0.0
        %758 = vmatprep.subr.mxu0 0.0
        %759 = vmatpush1.xpose.msra.mxu0 0.0
        %760 = vmatprep.subr.mxu0 0.0
        %761 = vmatpush1.xpose.msra.mxu0 0.0
        %762 = vmatprep.subr.mxu0 0.0
        %763 = vmatpush1.xpose.msra.mxu0 0.0
        %764 = vmatprep.subr.mxu0 0.0
        %765 = vmatpush1.xpose.msra.mxu0 0.0
        %766 = vmatprep.subr.mxu0 0.0
        %767 = vmatpush1.xpose.msra.mxu0 %v734
        %768 = vmatprep.subr.mxu0 0.0
        %769 = vmatpush2.xpose.msra.mxu0 0.0
        %770 = vmatprep.subr.mxu0 0.0
        %771 = vmatpush2.xpose.msra.mxu0 0.0
        %772 = vmatprep.subr.mxu0 0.0
        %773 = vmatpush2.xpose.msra.mxu0 0.0
        %774 = vmatprep.subr.mxu0 0.0
        %775 = vmatpush2.xpose.msra.mxu0 0.0
        %776 = vmatprep.subr.mxu0 0.0
        %777 = vmatpush2.xpose.msra.mxu0 0.0
        %778 = vmatprep.subr.mxu0 0.0
        %779 = vmatpush2.xpose.msra.mxu0 0.0
        %780 = vmatprep.subr.mxu0 0.0
        %781 = vmatpush2.xpose.msra.mxu0 0.0
        %782 = vmatprep.subr.mxu0 0.0
        %783 = vmatpush2.xpose.msra.mxu0 0.0
        %784 = vmatprep.subr.mxu0 0.0
        %785 = vmatpush2.xpose.msra.mxu0 0.0
        %786 = vmatprep.subr.mxu0 0.0
        %787 = vmatpush2.xpose.msra.mxu0 0.0
        %788 = vmatprep.subr.mxu0 0.0
        %789 = vmatpush2.xpose.msra.mxu0 0.0
        %790 = vmatprep.subr.mxu0 0.0
        %791 = vmatpush2.xpose.msra.mxu0 0.0
        %792 = vmatprep.subr.mxu0 0.0
        %793 = vmatpush2.xpose.msra.mxu0 0.0
        %794 = vmatprep.subr.mxu0 0.0
        %795 = vmatpush2.xpose.msra.mxu0 0.0
        %796 = vmatprep.subr.mxu0 0.0
        %797 = vmatpush2.xpose.msra.mxu0 0.0
        %798 = vmatprep.subr.mxu0 0.0
        %799 = vmatpush2.xpose.msra.mxu0 0.0
        %800 = vmatprep.mubr.f32.mxu0 0.0
        %801 = vmatmul.mubr.f32.gmra.mxu0 %v732
        %v802 = vpop.f32.mrf.mxu0
        %v803 = vadd.f32 0.0, %v802
        %v804 = vpop.f32.mrf.mxu0
        %805 = vdwg.mxu0
        %v806 = vsel %vm731, %v502, 0
        %v808 = vsel %vm731, %v588, 0
        %810 = vmatprep.subr.mxu0 0.0
        %811 = vmatpush1.xpose.msra.mxu0 0.0
        %812 = vmatprep.subr.mxu0 0.0
        %813 = vmatpush1.xpose.msra.mxu0 0.0
        %814 = vmatprep.subr.mxu0 0.0
        %815 = vmatpush1.xpose.msra.mxu0 0.0
        %816 = vmatprep.subr.mxu0 0.0
        %817 = vmatpush1.xpose.msra.mxu0 0.0
        %818 = vmatprep.subr.mxu0 0.0
        %819 = vmatpush1.xpose.msra.mxu0 0.0
        %820 = vmatprep.subr.mxu0 0.0
        %821 = vmatpush1.xpose.msra.mxu0 0.0
        %822 = vmatprep.subr.mxu0 0.0
        %823 = vmatpush1.xpose.msra.mxu0 0.0
        %824 = vmatprep.subr.mxu0 0.0
        %825 = vmatpush1.xpose.msra.mxu0 0.0
        %826 = vmatprep.subr.mxu0 0.0
        %827 = vmatpush1.xpose.msra.mxu0 0.0
        %828 = vmatprep.subr.mxu0 0.0
        %829 = vmatpush1.xpose.msra.mxu0 0.0
        %830 = vmatprep.subr.mxu0 0.0
        %831 = vmatpush1.xpose.msra.mxu0 0.0
        %832 = vmatprep.subr.mxu0 0.0
        %833 = vmatpush1.xpose.msra.mxu0 0.0
        %834 = vmatprep.subr.mxu0 0.0
        %835 = vmatpush1.xpose.msra.mxu0 0.0
        %836 = vmatprep.subr.mxu0 0.0
        %837 = vmatpush1.xpose.msra.mxu0 0.0
        %838 = vmatprep.subr.mxu0 0.0
        %839 = vmatpush1.xpose.msra.mxu0 0.0
        %840 = vmatprep.subr.mxu0 0.0
        %841 = vmatpush1.xpose.msra.mxu0 %v808
        %842 = vmatprep.subr.mxu0 0.0
        %843 = vmatpush2.xpose.msra.mxu0 0.0
        %844 = vmatprep.subr.mxu0 0.0
        %845 = vmatpush2.xpose.msra.mxu0 0.0
        %846 = vmatprep.subr.mxu0 0.0
        %847 = vmatpush2.xpose.msra.mxu0 0.0
        %848 = vmatprep.subr.mxu0 0.0
        %849 = vmatpush2.xpose.msra.mxu0 0.0
        %850 = vmatprep.subr.mxu0 0.0
        %851 = vmatpush2.xpose.msra.mxu0 0.0
        %852 = vmatprep.subr.mxu0 0.0
        %853 = vmatpush2.xpose.msra.mxu0 0.0
        %854 = vmatprep.subr.mxu0 0.0
        %855 = vmatpush2.xpose.msra.mxu0 0.0
        %856 = vmatprep.subr.mxu0 0.0
        %857 = vmatpush2.xpose.msra.mxu0 0.0
        %858 = vmatprep.subr.mxu0 0.0
        %859 = vmatpush2.xpose.msra.mxu0 0.0
        %860 = vmatprep.subr.mxu0 0.0
        %861 = vmatpush2.xpose.msra.mxu0 0.0
        %862 = vmatprep.subr.mxu0 0.0
        %863 = vmatpush2.xpose.msra.mxu0 0.0
        %864 = vmatprep.subr.mxu0 0.0
        %865 = vmatpush2.xpose.msra.mxu0 0.0
        %866 = vmatprep.subr.mxu0 0.0
        %867 = vmatpush2.xpose.msra.mxu0 0.0
        %868 = vmatprep.subr.mxu0 0.0
        %869 = vmatpush2.xpose.msra.mxu0 0.0
        %870 = vmatprep.subr.mxu0 0.0
        %871 = vmatpush2.xpose.msra.mxu0 0.0
        %872 = vmatprep.subr.mxu0 0.0
        %873 = vmatpush2.xpose.msra.mxu0 0.0
        %874 = vmatprep.mubr.f32.mxu0 0.0
        %875 = vmatmul.mubr.f32.gmra.mxu0 %v806
        %v876 = vpop.f32.mrf.mxu0
        %v877 = vadd.f32 0.0, %v876
        %v878 = vpop.f32.mrf.mxu0
        %879 = vdwg.mxu0
        %v880 = vsel %vm731, %v680, 0
        %v882 = vsel %vm731, %v694, 0
        %884 = vmatprep.subr.mxu0 0.0
        %885 = vmatpush1.xpose.msra.mxu0 0.0
        %886 = vmatprep.subr.mxu0 0.0
        %887 = vmatpush1.xpose.msra.mxu0 0.0
        %888 = vmatprep.subr.mxu0 0.0
        %889 = vmatpush1.xpose.msra.mxu0 0.0
        %890 = vmatprep.subr.mxu0 0.0
        %891 = vmatpush1.xpose.msra.mxu0 0.0
        %892 = vmatprep.subr.mxu0 0.0
        %893 = vmatpush1.xpose.msra.mxu0 0.0
        %894 = vmatprep.subr.mxu0 0.0
        %895 = vmatpush1.xpose.msra.mxu0 0.0
        %896 = vmatprep.subr.mxu0 0.0
        %897 = vmatpush1.xpose.msra.mxu0 0.0
        %898 = vmatprep.subr.mxu0 0.0
        %899 = vmatpush1.xpose.msra.mxu0 0.0
        %900 = vmatprep.subr.mxu0 0.0
        %901 = vmatpush1.xpose.msra.mxu0 0.0
        %902 = vmatprep.subr.mxu0 0.0
        %903 = vmatpush1.xpose.msra.mxu0 0.0
        %904 = vmatprep.subr.mxu0 0.0
        %905 = vmatpush1.xpose.msra.mxu0 0.0
        %906 = vmatprep.subr.mxu0 0.0
        %907 = vmatpush1.xpose.msra.mxu0 0.0
        %908 = vmatprep.subr.mxu0 0.0
        %909 = vmatpush1.xpose.msra.mxu0 0.0
        %910 = vmatprep.subr.mxu0 0.0
        %911 = vmatpush1.xpose.msra.mxu0 0.0
        %912 = vmatprep.subr.mxu0 0.0
        %913 = vmatpush1.xpose.msra.mxu0 0.0
        %914 = vmatprep.subr.mxu0 0.0
        %915 = vmatpush1.xpose.msra.mxu0 %v882
        %916 = vmatprep.subr.mxu0 0.0
        %917 = vmatpush2.xpose.msra.mxu0 0.0
        %918 = vmatprep.subr.mxu0 0.0
        %919 = vmatpush2.xpose.msra.mxu0 0.0
        %920 = vmatprep.subr.mxu0 0.0
        %921 = vmatpush2.xpose.msra.mxu0 0.0
        %922 = vmatprep.subr.mxu0 0.0
        %923 = vmatpush2.xpose.msra.mxu0 0.0
        %924 = vmatprep.subr.mxu0 0.0
        %925 = vmatpush2.xpose.msra.mxu0 0.0
        %926 = vmatprep.subr.mxu0 0.0
        %927 = vmatpush2.xpose.msra.mxu0 0.0
        %928 = vmatprep.subr.mxu0 0.0
        %929 = vmatpush2.xpose.msra.mxu0 0.0
        %930 = vmatprep.subr.mxu0 0.0
        %931 = vmatpush2.xpose.msra.mxu0 0.0
        %932 = vmatprep.subr.mxu0 0.0
        %933 = vmatpush2.xpose.msra.mxu0 0.0
        %934 = vmatprep.subr.mxu0 0.0
        %935 = vmatpush2.xpose.msra.mxu0 0.0
        %936 = vmatprep.subr.mxu0 0.0
        %937 = vmatpush2.xpose.msra.mxu0 0.0
        %938 = vmatprep.subr.mxu0 0.0
        %939 = vmatpush2.xpose.msra.mxu0 0.0
        %940 = vmatprep.subr.mxu0 0.0
        %941 = vmatpush2.xpose.msra.mxu0 0.0
        %942 = vmatprep.subr.mxu0 0.0
        %943 = vmatpush2.xpose.msra.mxu0 0.0
        %944 = vmatprep.subr.mxu0 0.0
        %945 = vmatpush2.xpose.msra.mxu0 0.0
        %946 = vmatprep.subr.mxu0 0.0
        %947 = vmatpush2.xpose.msra.mxu0 0.0
        %948 = vmatprep.mubr.f32.mxu0 0.0
        %949 = vmatmul.mubr.f32.gmra.mxu0 %v880
        %v950 = vpop.f32.mrf.mxu0
        %v951 = vadd.f32 0.0, %v950
        %v952 = vpop.f32.mrf.mxu0
        %953 = vdwg.mxu0
        %v954 = vsel %vm731, %v682, 0
        %v956 = vsel %vm731, %v696, 0
        %958 = vmatprep.subr.mxu0 0.0
        %959 = vmatpush1.xpose.msra.mxu0 0.0
        %960 = vmatprep.subr.mxu0 0.0
        %961 = vmatpush1.xpose.msra.mxu0 0.0
        %962 = vmatprep.subr.mxu0 0.0
        %963 = vmatpush1.xpose.msra.mxu0 0.0
        %964 = vmatprep.subr.mxu0 0.0
        %965 = vmatpush1.xpose.msra.mxu0 0.0
        %966 = vmatprep.subr.mxu0 0.0
        %967 = vmatpush1.xpose.msra.mxu0 0.0
        %968 = vmatprep.subr.mxu0 0.0
        %969 = vmatpush1.xpose.msra.mxu0 0.0
        %970 = vmatprep.subr.mxu0 0.0
        %971 = vmatpush1.xpose.msra.mxu0 0.0
        %972 = vmatprep.subr.mxu0 0.0
        %973 = vmatpush1.xpose.msra.mxu0 0.0
        %974 = vmatprep.subr.mxu0 0.0
        %975 = vmatpush1.xpose.msra.mxu0 0.0
        %976 = vmatprep.subr.mxu0 0.0
        %977 = vmatpush1.xpose.msra.mxu0 0.0
        %978 = vmatprep.subr.mxu0 0.0
        %979 = vmatpush1.xpose.msra.mxu0 0.0
        %980 = vmatprep.subr.mxu0 0.0
        %981 = vmatpush1.xpose.msra.mxu0 0.0
        %982 = vmatprep.subr.mxu0 0.0
        %983 = vmatpush1.xpose.msra.mxu0 0.0
        %984 = vmatprep.subr.mxu0 0.0
        %985 = vmatpush1.xpose.msra.mxu0 0.0
        %986 = vmatprep.subr.mxu0 0.0
        %987 = vmatpush1.xpose.msra.mxu0 0.0
        %988 = vmatprep.subr.mxu0 0.0
        %989 = vmatpush1.xpose.msra.mxu0 %v956
        %990 = vmatprep.subr.mxu0 0.0
        %991 = vmatpush2.xpose.msra.mxu0 0.0
        %992 = vmatprep.subr.mxu0 0.0
        %993 = vmatpush2.xpose.msra.mxu0 0.0
        %994 = vmatprep.subr.mxu0 0.0
        %995 = vmatpush2.xpose.msra.mxu0 0.0
        %996 = vmatprep.subr.mxu0 0.0
        %997 = vmatpush2.xpose.msra.mxu0 0.0
        %998 = vmatprep.subr.mxu0 0.0
        %999 = vmatpush2.xpose.msra.mxu0 0.0
        %1000 = vmatprep.subr.mxu0 0.0
        %1001 = vmatpush2.xpose.msra.mxu0 0.0
        %1002 = vmatprep.subr.mxu0 0.0
        %1003 = vmatpush2.xpose.msra.mxu0 0.0
        %1004 = vmatprep.subr.mxu0 0.0
        %1005 = vmatpush2.xpose.msra.mxu0 0.0
        %1006 = vmatprep.subr.mxu0 0.0
        %1007 = vmatpush2.xpose.msra.mxu0 0.0
        %1008 = vmatprep.subr.mxu0 0.0
        %1009 = vmatpush2.xpose.msra.mxu0 0.0
        %1010 = vmatprep.subr.mxu0 0.0
        %1011 = vmatpush2.xpose.msra.mxu0 0.0
        %1012 = vmatprep.subr.mxu0 0.0
        %1013 = vmatpush2.xpose.msra.mxu0 0.0
        %1014 = vmatprep.subr.mxu0 0.0
        %1015 = vmatpush2.xpose.msra.mxu0 0.0
        %1016 = vmatprep.subr.mxu0 0.0
        %1017 = vmatpush2.xpose.msra.mxu0 0.0
        %1018 = vmatprep.subr.mxu0 0.0
        %1019 = vmatpush2.xpose.msra.mxu0 0.0
        %1020 = vmatprep.subr.mxu0 0.0
        %1021 = vmatpush2.xpose.msra.mxu0 0.0
        %1022 = vmatprep.mubr.f32.mxu0 0.0
        %1023 = vmatmul.mubr.f32.gmra.mxu0 %v954
        %v1024 = vpop.f32.mrf.mxu0
        %v1025 = vadd.f32 0.0, %v1024
        %v1026 = vpop.f32.mrf.mxu0
        %1027 = vdwg.mxu0
        %v1028 = vsel %vm731, %v684, 0
        %v1030 = vsel %vm731, %v698, 0
        %1032 = vmatprep.subr.mxu0 0.0
        %1033 = vmatpush1.xpose.msra.mxu0 0.0
        %1034 = vmatprep.subr.mxu0 0.0
        %1035 = vmatpush1.xpose.msra.mxu0 0.0
        %1036 = vmatprep.subr.mxu0 0.0
        %1037 = vmatpush1.xpose.msra.mxu0 0.0
        %1038 = vmatprep.subr.mxu0 0.0
        %1039 = vmatpush1.xpose.msra.mxu0 0.0
        %1040 = vmatprep.subr.mxu0 0.0
        %1041 = vmatpush1.xpose.msra.mxu0 0.0
        %1042 = vmatprep.subr.mxu0 0.0
        %1043 = vmatpush1.xpose.msra.mxu0 0.0
        %1044 = vmatprep.subr.mxu0 0.0
        %1045 = vmatpush1.xpose.msra.mxu0 0.0
        %1046 = vmatprep.subr.mxu0 0.0
        %1047 = vmatpush1.xpose.msra.mxu0 0.0
        %1048 = vmatprep.subr.mxu0 0.0
        %1049 = vmatpush1.xpose.msra.mxu0 0.0
        %1050 = vmatprep.subr.mxu0 0.0
        %1051 = vmatpush1.xpose.msra.mxu0 0.0
        %1052 = vmatprep.subr.mxu0 0.0
        %1053 = vmatpush1.xpose.msra.mxu0 0.0
        %1054 = vmatprep.subr.mxu0 0.0
        %1055 = vmatpush1.xpose.msra.mxu0 0.0
        %1056 = vmatprep.subr.mxu0 0.0
        %1057 = vmatpush1.xpose.msra.mxu0 0.0
        %1058 = vmatprep.subr.mxu0 0.0
        %1059 = vmatpush1.xpose.msra.mxu0 0.0
        %1060 = vmatprep.subr.mxu0 0.0
        %1061 = vmatpush1.xpose.msra.mxu0 0.0
        %1062 = vmatprep.subr.mxu0 0.0
        %1063 = vmatpush1.xpose.msra.mxu0 %v1030
        %1064 = vmatprep.subr.mxu0 0.0
        %1065 = vmatpush2.xpose.msra.mxu0 0.0
        %1066 = vmatprep.subr.mxu0 0.0
        %1067 = vmatpush2.xpose.msra.mxu0 0.0
        %1068 = vmatprep.subr.mxu0 0.0
        %1069 = vmatpush2.xpose.msra.mxu0 0.0
        %1070 = vmatprep.subr.mxu0 0.0
        %1071 = vmatpush2.xpose.msra.mxu0 0.0
        %1072 = vmatprep.subr.mxu0 0.0
        %1073 = vmatpush2.xpose.msra.mxu0 0.0
        %1074 = vmatprep.subr.mxu0 0.0
        %1075 = vmatpush2.xpose.msra.mxu0 0.0
        %1076 = vmatprep.subr.mxu0 0.0
        %1077 = vmatpush2.xpose.msra.mxu0 0.0
        %1078 = vmatprep.subr.mxu0 0.0
        %1079 = vmatpush2.xpose.msra.mxu0 0.0
        %1080 = vmatprep.subr.mxu0 0.0
        %1081 = vmatpush2.xpose.msra.mxu0 0.0
        %1082 = vmatprep.subr.mxu0 0.0
        %1083 = vmatpush2.xpose.msra.mxu0 0.0
        %1084 = vmatprep.subr.mxu0 0.0
        %1085 = vmatpush2.xpose.msra.mxu0 0.0
        %1086 = vmatprep.subr.mxu0 0.0
        %1087 = vmatpush2.xpose.msra.mxu0 0.0
        %1088 = vmatprep.subr.mxu0 0.0
        %1089 = vmatpush2.xpose.msra.mxu0 0.0
        %1090 = vmatprep.subr.mxu0 0.0
        %1091 = vmatpush2.xpose.msra.mxu0 0.0
        %1092 = vmatprep.subr.mxu0 0.0
        %1093 = vmatpush2.xpose.msra.mxu0 0.0
        %1094 = vmatprep.subr.mxu0 0.0
        %1095 = vmatpush2.xpose.msra.mxu0 0.0
        %1096 = vmatprep.mubr.f32.mxu0 0.0
        %1097 = vmatmul.mubr.f32.gmra.mxu0 %v1028
        %v1098 = vpop.f32.mrf.mxu0
        %v1099 = vadd.f32 0.0, %v1098
        %v1100 = vpop.f32.mrf.mxu0
        %1101 = vdwg.mxu0
        %v1102 = vsel %vm731, %v686, 0
        %v1104 = vsel %vm731, %v700, 0
        %1106 = vmatprep.subr.mxu0 0.0
        %1107 = vmatpush1.xpose.msra.mxu0 0.0
        %1108 = vmatprep.subr.mxu0 0.0
        %1109 = vmatpush1.xpose.msra.mxu0 0.0
        %1110 = vmatprep.subr.mxu0 0.0
        %1111 = vmatpush1.xpose.msra.mxu0 0.0
        %1112 = vmatprep.subr.mxu0 0.0
        %1113 = vmatpush1.xpose.msra.mxu0 0.0
        %1114 = vmatprep.subr.mxu0 0.0
        %1115 = vmatpush1.xpose.msra.mxu0 0.0
        %1116 = vmatprep.subr.mxu0 0.0
        %1117 = vmatpush1.xpose.msra.mxu0 0.0
        %1118 = vmatprep.subr.mxu0 0.0
        %1119 = vmatpush1.xpose.msra.mxu0 0.0
        %1120 = vmatprep.subr.mxu0 0.0
        %1121 = vmatpush1.xpose.msra.mxu0 0.0
        %1122 = vmatprep.subr.mxu0 0.0
        %1123 = vmatpush1.xpose.msra.mxu0 0.0
        %1124 = vmatprep.subr.mxu0 0.0
        %1125 = vmatpush1.xpose.msra.mxu0 0.0
        %1126 = vmatprep.subr.mxu0 0.0
        %1127 = vmatpush1.xpose.msra.mxu0 0.0
        %1128 = vmatprep.subr.mxu0 0.0
        %1129 = vmatpush1.xpose.msra.mxu0 0.0
        %1130 = vmatprep.subr.mxu0 0.0
        %1131 = vmatpush1.xpose.msra.mxu0 0.0
        %1132 = vmatprep.subr.mxu0 0.0
        %1133 = vmatpush1.xpose.msra.mxu0 0.0
        %1134 = vmatprep.subr.mxu0 0.0
        %1135 = vmatpush1.xpose.msra.mxu0 0.0
        %1136 = vmatprep.subr.mxu0 0.0
        %1137 = vmatpush1.xpose.msra.mxu0 %v1104
        %1138 = vmatprep.subr.mxu0 0.0
        %1139 = vmatpush2.xpose.msra.mxu0 0.0
        %1140 = vmatprep.subr.mxu0 0.0
        %1141 = vmatpush2.xpose.msra.mxu0 0.0
        %1142 = vmatprep.subr.mxu0 0.0
        %1143 = vmatpush2.xpose.msra.mxu0 0.0
        %1144 = vmatprep.subr.mxu0 0.0
        %1145 = vmatpush2.xpose.msra.mxu0 0.0
        %1146 = vmatprep.subr.mxu0 0.0
        %1147 = vmatpush2.xpose.msra.mxu0 0.0
        %1148 = vmatprep.subr.mxu0 0.0
        %1149 = vmatpush2.xpose.msra.mxu0 0.0
        %1150 = vmatprep.subr.mxu0 0.0
        %1151 = vmatpush2.xpose.msra.mxu0 0.0
        %1152 = vmatprep.subr.mxu0 0.0
        %1153 = vmatpush2.xpose.msra.mxu0 0.0
        %1154 = vmatprep.subr.mxu0 0.0
        %1155 = vmatpush2.xpose.msra.mxu0 0.0
        %1156 = vmatprep.subr.mxu0 0.0
        %1157 = vmatpush2.xpose.msra.mxu0 0.0
        %1158 = vmatprep.subr.mxu0 0.0
        %1159 = vmatpush2.xpose.msra.mxu0 0.0
        %1160 = vmatprep.subr.mxu0 0.0
        %1161 = vmatpush2.xpose.msra.mxu0 0.0
        %1162 = vmatprep.subr.mxu0 0.0
        %1163 = vmatpush2.xpose.msra.mxu0 0.0
        %1164 = vmatprep.subr.mxu0 0.0
        %1165 = vmatpush2.xpose.msra.mxu0 0.0
        %1166 = vmatprep.subr.mxu0 0.0
        %1167 = vmatpush2.xpose.msra.mxu0 0.0
        %1168 = vmatprep.subr.mxu0 0.0
        %1169 = vmatpush2.xpose.msra.mxu0 0.0
        %1170 = vmatprep.mubr.f32.mxu0 0.0
        %1171 = vmatmul.mubr.f32.gmra.mxu0 %v1102
        %v1172 = vpop.f32.mrf.mxu0
        %v1173 = vadd.f32 0.0, %v1172
        %v1174 = vpop.f32.mrf.mxu0
        %1175 = vdwg.mxu0
        %v1176 = vsel %vm731, %v688, 0
        %v1178 = vsel %vm731, %v702, 0
        %1180 = vmatprep.subr.mxu0 0.0
        %1181 = vmatpush1.xpose.msra.mxu0 0.0
        %1182 = vmatprep.subr.mxu0 0.0
        %1183 = vmatpush1.xpose.msra.mxu0 0.0
        %1184 = vmatprep.subr.mxu0 0.0
        %1185 = vmatpush1.xpose.msra.mxu0 0.0
        %1186 = vmatprep.subr.mxu0 0.0
        %1187 = vmatpush1.xpose.msra.mxu0 0.0
        %1188 = vmatprep.subr.mxu0 0.0
        %1189 = vmatpush1.xpose.msra.mxu0 0.0
        %1190 = vmatprep.subr.mxu0 0.0
        %1191 = vmatpush1.xpose.msra.mxu0 0.0
        %1192 = vmatprep.subr.mxu0 0.0
        %1193 = vmatpush1.xpose.msra.mxu0 0.0
        %1194 = vmatprep.subr.mxu0 0.0
        %1195 = vmatpush1.xpose.msra.mxu0 0.0
        %1196 = vmatprep.subr.mxu0 0.0
        %1197 = vmatpush1.xpose.msra.mxu0 0.0
        %1198 = vmatprep.subr.mxu0 0.0
        %1199 = vmatpush1.xpose.msra.mxu0 0.0
        %1200 = vmatprep.subr.mxu0 0.0
        %1201 = vmatpush1.xpose.msra.mxu0 0.0
        %1202 = vmatprep.subr.mxu0 0.0
        %1203 = vmatpush1.xpose.msra.mxu0 0.0
        %1204 = vmatprep.subr.mxu0 0.0
        %1205 = vmatpush1.xpose.msra.mxu0 0.0
        %1206 = vmatprep.subr.mxu0 0.0
        %1207 = vmatpush1.xpose.msra.mxu0 0.0
        %1208 = vmatprep.subr.mxu0 0.0
        %1209 = vmatpush1.xpose.msra.mxu0 0.0
        %1210 = vmatprep.subr.mxu0 0.0
        %1211 = vmatpush1.xpose.msra.mxu0 %v1178
        %1212 = vmatprep.subr.mxu0 0.0
        %1213 = vmatpush2.xpose.msra.mxu0 0.0
        %1214 = vmatprep.subr.mxu0 0.0
        %1215 = vmatpush2.xpose.msra.mxu0 0.0
        %1216 = vmatprep.subr.mxu0 0.0
        %1217 = vmatpush2.xpose.msra.mxu0 0.0
        %1218 = vmatprep.subr.mxu0 0.0
        %1219 = vmatpush2.xpose.msra.mxu0 0.0
        %1220 = vmatprep.subr.mxu0 0.0
        %1221 = vmatpush2.xpose.msra.mxu0 0.0
        %1222 = vmatprep.subr.mxu0 0.0
        %1223 = vmatpush2.xpose.msra.mxu0 0.0
        %1224 = vmatprep.subr.mxu0 0.0
        %1225 = vmatpush2.xpose.msra.mxu0 0.0
        %1226 = vmatprep.subr.mxu0 0.0
        %1227 = vmatpush2.xpose.msra.mxu0 0.0
        %1228 = vmatprep.subr.mxu0 0.0
        %1229 = vmatpush2.xpose.msra.mxu0 0.0
        %1230 = vmatprep.subr.mxu0 0.0
        %1231 = vmatpush2.xpose.msra.mxu0 0.0
        %1232 = vmatprep.subr.mxu0 0.0
        %1233 = vmatpush2.xpose.msra.mxu0 0.0
        %1234 = vmatprep.subr.mxu0 0.0
        %1235 = vmatpush2.xpose.msra.mxu0 0.0
        %1236 = vmatprep.subr.mxu0 0.0
        %1237 = vmatpush2.xpose.msra.mxu0 0.0
        %1238 = vmatprep.subr.mxu0 0.0
        %1239 = vmatpush2.xpose.msra.mxu0 0.0
        %1240 = vmatprep.subr.mxu0 0.0
        %1241 = vmatpush2.xpose.msra.mxu0 0.0
        %1242 = vmatprep.subr.mxu0 0.0
        %1243 = vmatpush2.xpose.msra.mxu0 0.0
        %1244 = vmatprep.mubr.f32.mxu0 0.0
        %1245 = vmatmul.mubr.f32.gmra.mxu0 %v1176
        %v1246 = vpop.f32.mrf.mxu0
        %v1247 = vadd.f32 0.0, %v1246
        %v1248 = vpop.f32.mrf.mxu0
        %1249 = vdwg.mxu0
        %v1250 = vsel %vm731, %v690, 0
        %v1252 = vsel %vm731, %v704, 0
        %1254 = vmatprep.subr.mxu0 0.0
        %1255 = vmatpush1.xpose.msra.mxu0 0.0
        %1256 = vmatprep.subr.mxu0 0.0
        %1257 = vmatpush1.xpose.msra.mxu0 0.0
        %1258 = vmatprep.subr.mxu0 0.0
        %1259 = vmatpush1.xpose.msra.mxu0 0.0
        %1260 = vmatprep.subr.mxu0 0.0
        %1261 = vmatpush1.xpose.msra.mxu0 0.0
        %1262 = vmatprep.subr.mxu0 0.0
        %1263 = vmatpush1.xpose.msra.mxu0 0.0
        %1264 = vmatprep.subr.mxu0 0.0
        %1265 = vmatpush1.xpose.msra.mxu0 0.0
        %1266 = vmatprep.subr.mxu0 0.0
        %1267 = vmatpush1.xpose.msra.mxu0 0.0
        %1268 = vmatprep.subr.mxu0 0.0
        %1269 = vmatpush1.xpose.msra.mxu0 0.0
        %1270 = vmatprep.subr.mxu0 0.0
        %1271 = vmatpush1.xpose.msra.mxu0 0.0
        %1272 = vmatprep.subr.mxu0 0.0
        %1273 = vmatpush1.xpose.msra.mxu0 0.0
        %1274 = vmatprep.subr.mxu0 0.0
        %1275 = vmatpush1.xpose.msra.mxu0 0.0
        %1276 = vmatprep.subr.mxu0 0.0
        %1277 = vmatpush1.xpose.msra.mxu0 0.0
        %1278 = vmatprep.subr.mxu0 0.0
        %1279 = vmatpush1.xpose.msra.mxu0 0.0
        %1280 = vmatprep.subr.mxu0 0.0
        %1281 = vmatpush1.xpose.msra.mxu0 0.0
        %1282 = vmatprep.subr.mxu0 0.0
        %1283 = vmatpush1.xpose.msra.mxu0 0.0
        %1284 = vmatprep.subr.mxu0 0.0
        %1285 = vmatpush1.xpose.msra.mxu0 %v1252
        %1286 = vmatprep.subr.mxu0 0.0
        %1287 = vmatpush2.xpose.msra.mxu0 0.0
        %1288 = vmatprep.subr.mxu0 0.0
        %1289 = vmatpush2.xpose.msra.mxu0 0.0
        %1290 = vmatprep.subr.mxu0 0.0
        %1291 = vmatpush2.xpose.msra.mxu0 0.0
        %1292 = vmatprep.subr.mxu0 0.0
        %1293 = vmatpush2.xpose.msra.mxu0 0.0
        %1294 = vmatprep.subr.mxu0 0.0
        %1295 = vmatpush2.xpose.msra.mxu0 0.0
        %1296 = vmatprep.subr.mxu0 0.0
        %1297 = vmatpush2.xpose.msra.mxu0 0.0
        %1298 = vmatprep.subr.mxu0 0.0
        %1299 = vmatpush2.xpose.msra.mxu0 0.0
        %1300 = vmatprep.subr.mxu0 0.0
        %1301 = vmatpush2.xpose.msra.mxu0 0.0
        %1302 = vmatprep.subr.mxu0 0.0
        %1303 = vmatpush2.xpose.msra.mxu0 0.0
        %1304 = vmatprep.subr.mxu0 0.0
        %1305 = vmatpush2.xpose.msra.mxu0 0.0
        %1306 = vmatprep.subr.mxu0 0.0
        %1307 = vmatpush2.xpose.msra.mxu0 0.0
        %1308 = vmatprep.subr.mxu0 0.0
        %1309 = vmatpush2.xpose.msra.mxu0 0.0
        %1310 = vmatprep.subr.mxu0 0.0
        %1311 = vmatpush2.xpose.msra.mxu0 0.0
        %1312 = vmatprep.subr.mxu0 0.0
        %1313 = vmatpush2.xpose.msra.mxu0 0.0
        %1314 = vmatprep.subr.mxu0 0.0
        %1315 = vmatpush2.xpose.msra.mxu0 0.0
        %1316 = vmatprep.subr.mxu0 0.0
        %1317 = vmatpush2.xpose.msra.mxu0 0.0
        %1318 = vmatprep.mubr.f32.mxu0 0.0
        %1319 = vmatmul.mubr.f32.gmra.mxu0 %v1250
        %v1320 = vpop.f32.mrf.mxu0
        %v1321 = vadd.f32 0.0, %v1320
        %v1322 = vpop.f32.mrf.mxu0
        %1323 = vdwg.mxu0
        %v1324 = vmul.f32 %v803, 0.35355338
        %v1325 = vmul.f32 %v877, 0.35355338
        %v1326 = vmul.f32 %v951, 0.35355338
        %v1327 = vmul.f32 %v1025, 0.35355338
        %v1328 = vmul.f32 %v1099, 0.35355338
        %v1329 = vmul.f32 %v1173, 0.35355338
        %v1330 = vmul.f32 %v1247, 0.35355338
        %v1331 = vmul.f32 %v1321, 0.35355338
        %v1334 = vlaneseq
        %v1335 = vshrl.u32 %v1334, 7
        %v1336 = vsub.s32 0, %v1335
        %v1337 = vrot.slane %v729, %v1336
        %v1338 = vlaneseq
        %v1339 = vshrl.u32 %v1338, 7
        %v1340 = vsub.s32 0, %v1339
        %v1341 = vrot.slane %v730, %v1340
        %v1344 = vadd.f32 %v1324, %v1337
        %v1345 = vadd.f32 %v1325, %v1341
        %v1346 = vadd.f32 %v1326, %v1337
        %v1347 = vadd.f32 %v1327, %v1341
        %v1348 = vadd.f32 %v1328, %v1337
        %v1349 = vadd.f32 %v1329, %v1341
        %v1350 = vadd.f32 %v1330, %v1337
        %v1351 = vadd.f32 %v1331, %v1341
        %v1352 = vsel %vm731, %v1344, -inf
        %1353 = vmax.xlane.f32.xlu0 %v1352
        %v1354 = vpop.xlane.xlu0 %1353
        %v1355 = vsel %vm731, %v1345, -inf
        %1356 = vmax.xlane.f32.xlu0 %v1355
        %v1357 = vpop.xlane.xlu0 %1356
        %v1358 = vsel %vm731, %v1346, -inf
        %1359 = vmax.xlane.f32.xlu0 %v1358
        %v1360 = vpop.xlane.xlu0 %1359
        %v1361 = vsel %vm731, %v1347, -inf
        %1362 = vmax.xlane.f32.xlu0 %v1361
        %v1363 = vpop.xlane.xlu0 %1362
        %v1364 = vsel %vm731, %v1348, -inf
        %1365 = vmax.xlane.f32.xlu0 %v1364
        %v1366 = vpop.xlane.xlu0 %1365
        %v1367 = vsel %vm731, %v1349, -inf
        %1368 = vmax.xlane.f32.xlu0 %v1367
        %v1369 = vpop.xlane.xlu0 %1368
        %v1370 = vsel %vm731, %v1350, -inf
        %1371 = vmax.xlane.f32.xlu0 %v1370
        %v1372 = vpop.xlane.xlu0 %1371
        %v1373 = vsel %vm731, %v1351, -inf
        %1374 = vmax.xlane.f32.xlu0 %v1373
        %v1375 = vpop.xlane.xlu0 %1374
        %v1376 = vsub.f32 %v1344, %v1354
        %v1377 = vsub.f32 %v1345, %v1357
        %v1378 = vsub.f32 %v1346, %v1360
        %v1379 = vsub.f32 %v1347, %v1363
        %v1380 = vsub.f32 %v1348, %v1366
        %v1381 = vsub.f32 %v1349, %v1369
        %v1382 = vsub.f32 %v1350, %v1372
        %v1383 = vsub.f32 %v1351, %v1375
        %v1384 = vmul.f32 %v1376, 1.442695
        %v1385 = vpow.pop %v1384
        %v1386 = vmul.f32 %v1377, 1.442695
        %v1387 = vpow.pop %v1386
        %v1388 = vmul.f32 %v1378, 1.442695
        %v1389 = vpow.pop %v1388
        %v1390 = vmul.f32 %v1379, 1.442695
        %v1391 = vpow.pop %v1390
        %v1392 = vmul.f32 %v1380, 1.442695
        %v1393 = vpow.pop %v1392
        %v1394 = vmul.f32 %v1381, 1.442695
        %v1395 = vpow.pop %v1394
        %v1396 = vmul.f32 %v1382, 1.442695
        %v1397 = vpow.pop %v1396
        %v1398 = vmul.f32 %v1383, 1.442695
        %v1399 = vpow.pop %v1398
        %v1400 = vsel %vm731, %v1385, 0.0
        %1401 = vadd.xlane.f32.xlu0 %v1400
        %v1402 = vpop.xlane.xlu0 %1401
        %v1403 = vsel %vm731, %v1387, 0.0
        %1404 = vadd.xlane.f32.xlu0 %v1403
        %v1405 = vpop.xlane.xlu0 %1404
        %v1406 = vsel %vm731, %v1389, 0.0
        %1407 = vadd.xlane.f32.xlu0 %v1406
        %v1408 = vpop.xlane.xlu0 %1407
        %v1409 = vsel %vm731, %v1391, 0.0
        %1410 = vadd.xlane.f32.xlu0 %v1409
        %v1411 = vpop.xlane.xlu0 %1410
        %v1412 = vsel %vm731, %v1393, 0.0
        %1413 = vadd.xlane.f32.xlu0 %v1412
        %v1414 = vpop.xlane.xlu0 %1413
        %v1415 = vsel %vm731, %v1395, 0.0
        %1416 = vadd.xlane.f32.xlu0 %v1415
        %v1417 = vpop.xlane.xlu0 %1416
        %v1418 = vsel %vm731, %v1397, 0.0
        %1419 = vadd.xlane.f32.xlu0 %v1418
        %v1420 = vpop.xlane.xlu0 %1419
        %v1421 = vsel %vm731, %v1399, 0.0
        %1422 = vadd.xlane.f32.xlu0 %v1421
        %v1423 = vpop.xlane.xlu0 %1422
        %v1424 = vrcp.pop %v1402
        %v1425 = vrcp.pop %v1405
        %v1426 = vrcp.pop %v1408
        %v1427 = vrcp.pop %v1411
        %v1428 = vrcp.pop %v1414
        %v1429 = vrcp.pop %v1417
        %v1430 = vrcp.pop %v1420
        %v1431 = vrcp.pop %v1423
        %v1432 = vmul.f32 %v1385, %v1424
        %v1433 = vmul.f32 %v1387, %v1425
        %v1434 = vmul.f32 %v1389, %v1426
        %v1435 = vmul.f32 %v1391, %v1427
        %v1436 = vmul.f32 %v1393, %v1428
        %v1437 = vmul.f32 %v1395, %v1429
        %v1438 = vmul.f32 %v1397, %v1430
        %v1439 = vmul.f32 %v1399, %v1431
        %v1441 = vsel %vm731, %v1432, 0
        %1443 = vmatprep.subr.mxu0 0.0
        %1444 = vmatpush1.msra.mxu0 0.0
        %1445 = vmatprep.subr.mxu0 0.0
        %1446 = vmatpush1.msra.mxu0 0.0
        %1447 = vmatprep.subr.mxu0 0.0
        %1448 = vmatpush1.msra.mxu0 0.0
        %1449 = vmatprep.subr.mxu0 0.0
        %1450 = vmatpush1.msra.mxu0 0.0
        %1451 = vmatprep.subr.mxu0 0.0
        %1452 = vmatpush1.msra.mxu0 0.0
        %1453 = vmatprep.subr.mxu0 0.0
        %1454 = vmatpush1.msra.mxu0 0.0
        %1455 = vmatprep.subr.mxu0 0.0
        %1456 = vmatpush1.msra.mxu0 0.0
        %1457 = vmatprep.subr.mxu0 0.0
        %1458 = vmatpush1.msra.mxu0 0.0
        %1459 = vmatprep.subr.mxu0 0.0
        %1460 = vmatpush1.msra.mxu0 0.0
        %1461 = vmatprep.subr.mxu0 0.0
        %1462 = vmatpush1.msra.mxu0 0.0
        %1463 = vmatprep.subr.mxu0 0.0
        %1464 = vmatpush1.msra.mxu0 0.0
        %1465 = vmatprep.subr.mxu0 0.0
        %1466 = vmatpush1.msra.mxu0 0.0
        %1467 = vmatprep.subr.mxu0 0.0
        %1468 = vmatpush1.msra.mxu0 0.0
        %1469 = vmatprep.subr.mxu0 0.0
        %1470 = vmatpush1.msra.mxu0 0.0
        %1471 = vmatprep.subr.mxu0 0.0
        %1472 = vmatpush1.msra.mxu0 0.0
        %1473 = vmatprep.subr.mxu0 0.0
        %1474 = vmatpush1.msra.mxu0 %v669
        %1475 = vmatprep.subr.mxu0 0.0
        %1476 = vmatpush2.msra.mxu0 0.0
        %1477 = vmatprep.subr.mxu0 0.0
        %1478 = vmatpush2.msra.mxu0 0.0
        %1479 = vmatprep.subr.mxu0 0.0
        %1480 = vmatpush2.msra.mxu0 0.0
        %1481 = vmatprep.subr.mxu0 0.0
        %1482 = vmatpush2.msra.mxu0 0.0
        %1483 = vmatprep.subr.mxu0 0.0
        %1484 = vmatpush2.msra.mxu0 0.0
        %1485 = vmatprep.subr.mxu0 0.0
        %1486 = vmatpush2.msra.mxu0 0.0
        %1487 = vmatprep.subr.mxu0 0.0
        %1488 = vmatpush2.msra.mxu0 0.0
        %1489 = vmatprep.subr.mxu0 0.0
        %1490 = vmatpush2.msra.mxu0 0.0
        %1491 = vmatprep.subr.mxu0 0.0
        %1492 = vmatpush2.msra.mxu0 0.0
        %1493 = vmatprep.subr.mxu0 0.0
        %1494 = vmatpush2.msra.mxu0 0.0
        %1495 = vmatprep.subr.mxu0 0.0
        %1496 = vmatpush2.msra.mxu0 0.0
        %1497 = vmatprep.subr.mxu0 0.0
        %1498 = vmatpush2.msra.mxu0 0.0
        %1499 = vmatprep.subr.mxu0 0.0
        %1500 = vmatpush2.msra.mxu0 0.0
        %1501 = vmatprep.subr.mxu0 0.0
        %1502 = vmatpush2.msra.mxu0 0.0
        %1503 = vmatprep.subr.mxu0 0.0
        %1504 = vmatpush2.msra.mxu0 0.0
        %1505 = vmatprep.subr.mxu0 0.0
        %1506 = vmatpush2.msra.mxu0 0.0
        %1507 = vmatprep.mubr.f32.mxu0 0.0
        %1508 = vmatmul.mubr.f32.gmra.mxu0 %v1441
        %v1509 = vpop.f32.mrf.mxu0
        %v1510 = vadd.f32 0.0, %v1509
        %v1511 = vpop.f32.mrf.mxu0
        %1512 = vdwg.mxu0
        %v1514 = vsel %vm731, %v1433, 0
        %1516 = vmatprep.subr.mxu0 0.0
        %1517 = vmatpush1.msra.mxu0 0.0
        %1518 = vmatprep.subr.mxu0 0.0
        %1519 = vmatpush1.msra.mxu0 0.0
        %1520 = vmatprep.subr.mxu0 0.0
        %1521 = vmatpush1.msra.mxu0 0.0
        %1522 = vmatprep.subr.mxu0 0.0
        %1523 = vmatpush1.msra.mxu0 0.0
        %1524 = vmatprep.subr.mxu0 0.0
        %1525 = vmatpush1.msra.mxu0 0.0
        %1526 = vmatprep.subr.mxu0 0.0
        %1527 = vmatpush1.msra.mxu0 0.0
        %1528 = vmatprep.subr.mxu0 0.0
        %1529 = vmatpush1.msra.mxu0 0.0
        %1530 = vmatprep.subr.mxu0 0.0
        %1531 = vmatpush1.msra.mxu0 0.0
        %1532 = vmatprep.subr.mxu0 0.0
        %1533 = vmatpush1.msra.mxu0 0.0
        %1534 = vmatprep.subr.mxu0 0.0
        %1535 = vmatpush1.msra.mxu0 0.0
        %1536 = vmatprep.subr.mxu0 0.0
        %1537 = vmatpush1.msra.mxu0 0.0
        %1538 = vmatprep.subr.mxu0 0.0
        %1539 = vmatpush1.msra.mxu0 0.0
        %1540 = vmatprep.subr.mxu0 0.0
        %1541 = vmatpush1.msra.mxu0 0.0
        %1542 = vmatprep.subr.mxu0 0.0
        %1543 = vmatpush1.msra.mxu0 0.0
        %1544 = vmatprep.subr.mxu0 0.0
        %1545 = vmatpush1.msra.mxu0 0.0
        %1546 = vmatprep.subr.mxu0 0.0
        %1547 = vmatpush1.msra.mxu0 %v674
        %1548 = vmatprep.subr.mxu0 0.0
        %1549 = vmatpush2.msra.mxu0 0.0
        %1550 = vmatprep.subr.mxu0 0.0
        %1551 = vmatpush2.msra.mxu0 0.0
        %1552 = vmatprep.subr.mxu0 0.0
        %1553 = vmatpush2.msra.mxu0 0.0
        %1554 = vmatprep.subr.mxu0 0.0
        %1555 = vmatpush2.msra.mxu0 0.0
        %1556 = vmatprep.subr.mxu0 0.0
        %1557 = vmatpush2.msra.mxu0 0.0
        %1558 = vmatprep.subr.mxu0 0.0
        %1559 = vmatpush2.msra.mxu0 0.0
        %1560 = vmatprep.subr.mxu0 0.0
        %1561 = vmatpush2.msra.mxu0 0.0
        %1562 = vmatprep.subr.mxu0 0.0
        %1563 = vmatpush2.msra.mxu0 0.0
        %1564 = vmatprep.subr.mxu0 0.0
        %1565 = vmatpush2.msra.mxu0 0.0
        %1566 = vmatprep.subr.mxu0 0.0
        %1567 = vmatpush2.msra.mxu0 0.0
        %1568 = vmatprep.subr.mxu0 0.0
        %1569 = vmatpush2.msra.mxu0 0.0
        %1570 = vmatprep.subr.mxu0 0.0
        %1571 = vmatpush2.msra.mxu0 0.0
        %1572 = vmatprep.subr.mxu0 0.0
        %1573 = vmatpush2.msra.mxu0 0.0
        %1574 = vmatprep.subr.mxu0 0.0
        %1575 = vmatpush2.msra.mxu0 0.0
        %1576 = vmatprep.subr.mxu0 0.0
        %1577 = vmatpush2.msra.mxu0 0.0
        %1578 = vmatprep.subr.mxu0 0.0
        %1579 = vmatpush2.msra.mxu0 0.0
        %1580 = vmatprep.mubr.f32.mxu0 0.0
        %1581 = vmatmul.mubr.f32.gmra.mxu0 %v1514
        %v1582 = vpop.f32.mrf.mxu0
        %v1583 = vadd.f32 0.0, %v1582
        %v1584 = vpop.f32.mrf.mxu0
        %1585 = vdwg.mxu0
        %v1587 = vsel %vm731, %v1434, 0
        %1589 = vmatprep.subr.mxu0 0.0
        %1590 = vmatpush1.msra.mxu0 0.0
        %1591 = vmatprep.subr.mxu0 0.0
        %1592 = vmatpush1.msra.mxu0 0.0
        %1593 = vmatprep.subr.mxu0 0.0
        %1594 = vmatpush1.msra.mxu0 0.0
        %1595 = vmatprep.subr.mxu0 0.0
        %1596 = vmatpush1.msra.mxu0 0.0
        %1597 = vmatprep.subr.mxu0 0.0
        %1598 = vmatpush1.msra.mxu0 0.0
        %1599 = vmatprep.subr.mxu0 0.0
        %1600 = vmatpush1.msra.mxu0 0.0
        %1601 = vmatprep.subr.mxu0 0.0
        %1602 = vmatpush1.msra.mxu0 0.0
        %1603 = vmatprep.subr.mxu0 0.0
        %1604 = vmatpush1.msra.mxu0 0.0
        %1605 = vmatprep.subr.mxu0 0.0
        %1606 = vmatpush1.msra.mxu0 0.0
        %1607 = vmatprep.subr.mxu0 0.0
        %1608 = vmatpush1.msra.mxu0 0.0
        %1609 = vmatprep.subr.mxu0 0.0
        %1610 = vmatpush1.msra.mxu0 0.0
        %1611 = vmatprep.subr.mxu0 0.0
        %1612 = vmatpush1.msra.mxu0 0.0
        %1613 = vmatprep.subr.mxu0 0.0
        %1614 = vmatpush1.msra.mxu0 0.0
        %1615 = vmatprep.subr.mxu0 0.0
        %1616 = vmatpush1.msra.mxu0 0.0
        %1617 = vmatprep.subr.mxu0 0.0
        %1618 = vmatpush1.msra.mxu0 0.0
        %1619 = vmatprep.subr.mxu0 0.0
        %1620 = vmatpush1.msra.mxu0 %v708
        %1621 = vmatprep.subr.mxu0 0.0
        %1622 = vmatpush2.msra.mxu0 0.0
        %1623 = vmatprep.subr.mxu0 0.0
        %1624 = vmatpush2.msra.mxu0 0.0
        %1625 = vmatprep.subr.mxu0 0.0
        %1626 = vmatpush2.msra.mxu0 0.0
        %1627 = vmatprep.subr.mxu0 0.0
        %1628 = vmatpush2.msra.mxu0 0.0
        %1629 = vmatprep.subr.mxu0 0.0
        %1630 = vmatpush2.msra.mxu0 0.0
        %1631 = vmatprep.subr.mxu0 0.0
        %1632 = vmatpush2.msra.mxu0 0.0
        %1633 = vmatprep.subr.mxu0 0.0
        %1634 = vmatpush2.msra.mxu0 0.0
        %1635 = vmatprep.subr.mxu0 0.0
        %1636 = vmatpush2.msra.mxu0 0.0
        %1637 = vmatprep.subr.mxu0 0.0
        %1638 = vmatpush2.msra.mxu0 0.0
        %1639 = vmatprep.subr.mxu0 0.0
        %1640 = vmatpush2.msra.mxu0 0.0
        %1641 = vmatprep.subr.mxu0 0.0
        %1642 = vmatpush2.msra.mxu0 0.0
        %1643 = vmatprep.subr.mxu0 0.0
        %1644 = vmatpush2.msra.mxu0 0.0
        %1645 = vmatprep.subr.mxu0 0.0
        %1646 = vmatpush2.msra.mxu0 0.0
        %1647 = vmatprep.subr.mxu0 0.0
        %1648 = vmatpush2.msra.mxu0 0.0
        %1649 = vmatprep.subr.mxu0 0.0
        %1650 = vmatpush2.msra.mxu0 0.0
        %1651 = vmatprep.subr.mxu0 0.0
        %1652 = vmatpush2.msra.mxu0 0.0
        %1653 = vmatprep.mubr.f32.mxu0 0.0
        %1654 = vmatmul.mubr.f32.gmra.mxu0 %v1587
        %v1655 = vpop.f32.mrf.mxu0
        %v1656 = vadd.f32 0.0, %v1655
        %v1657 = vpop.f32.mrf.mxu0
        %1658 = vdwg.mxu0
        %v1660 = vsel %vm731, %v1435, 0
        %1662 = vmatprep.subr.mxu0 0.0
        %1663 = vmatpush1.msra.mxu0 0.0
        %1664 = vmatprep.subr.mxu0 0.0
        %1665 = vmatpush1.msra.mxu0 0.0
        %1666 = vmatprep.subr.mxu0 0.0
        %1667 = vmatpush1.msra.mxu0 0.0
        %1668 = vmatprep.subr.mxu0 0.0
        %1669 = vmatpush1.msra.mxu0 0.0
        %1670 = vmatprep.subr.mxu0 0.0
        %1671 = vmatpush1.msra.mxu0 0.0
        %1672 = vmatprep.subr.mxu0 0.0
        %1673 = vmatpush1.msra.mxu0 0.0
        %1674 = vmatprep.subr.mxu0 0.0
        %1675 = vmatpush1.msra.mxu0 0.0
        %1676 = vmatprep.subr.mxu0 0.0
        %1677 = vmatpush1.msra.mxu0 0.0
        %1678 = vmatprep.subr.mxu0 0.0
        %1679 = vmatpush1.msra.mxu0 0.0
        %1680 = vmatprep.subr.mxu0 0.0
        %1681 = vmatpush1.msra.mxu0 0.0
        %1682 = vmatprep.subr.mxu0 0.0
        %1683 = vmatpush1.msra.mxu0 0.0
        %1684 = vmatprep.subr.mxu0 0.0
        %1685 = vmatpush1.msra.mxu0 0.0
        %1686 = vmatprep.subr.mxu0 0.0
        %1687 = vmatpush1.msra.mxu0 0.0
        %1688 = vmatprep.subr.mxu0 0.0
        %1689 = vmatpush1.msra.mxu0 0.0
        %1690 = vmatprep.subr.mxu0 0.0
        %1691 = vmatpush1.msra.mxu0 0.0
        %1692 = vmatprep.subr.mxu0 0.0
        %1693 = vmatpush1.msra.mxu0 %v710
        %1694 = vmatprep.subr.mxu0 0.0
        %1695 = vmatpush2.msra.mxu0 0.0
        %1696 = vmatprep.subr.mxu0 0.0
        %1697 = vmatpush2.msra.mxu0 0.0
        %1698 = vmatprep.subr.mxu0 0.0
        %1699 = vmatpush2.msra.mxu0 0.0
        %1700 = vmatprep.subr.mxu0 0.0
        %1701 = vmatpush2.msra.mxu0 0.0
        %1702 = vmatprep.subr.mxu0 0.0
        %1703 = vmatpush2.msra.mxu0 0.0
        %1704 = vmatprep.subr.mxu0 0.0
        %1705 = vmatpush2.msra.mxu0 0.0
        %1706 = vmatprep.subr.mxu0 0.0
        %1707 = vmatpush2.msra.mxu0 0.0
        %1708 = vmatprep.subr.mxu0 0.0
        %1709 = vmatpush2.msra.mxu0 0.0
        %1710 = vmatprep.subr.mxu0 0.0
        %1711 = vmatpush2.msra.mxu0 0.0
        %1712 = vmatprep.subr.mxu0 0.0
        %1713 = vmatpush2.msra.mxu0 0.0
        %1714 = vmatprep.subr.mxu0 0.0
        %1715 = vmatpush2.msra.mxu0 0.0
        %1716 = vmatprep.subr.mxu0 0.0
        %1717 = vmatpush2.msra.mxu0 0.0
        %1718 = vmatprep.subr.mxu0 0.0
        %1719 = vmatpush2.msra.mxu0 0.0
        %1720 = vmatprep.subr.mxu0 0.0
        %1721 = vmatpush2.msra.mxu0 0.0
        %1722 = vmatprep.subr.mxu0 0.0
        %1723 = vmatpush2.msra.mxu0 0.0
        %1724 = vmatprep.subr.mxu0 0.0
        %1725 = vmatpush2.msra.mxu0 0.0
        %1726 = vmatprep.mubr.f32.mxu0 0.0
        %1727 = vmatmul.mubr.f32.gmra.mxu0 %v1660
        %v1728 = vpop.f32.mrf.mxu0
        %v1729 = vadd.f32 0.0, %v1728
        %v1730 = vpop.f32.mrf.mxu0
        %1731 = vdwg.mxu0
        %v1733 = vsel %vm731, %v1436, 0
        %1735 = vmatprep.subr.mxu0 0.0
        %1736 = vmatpush1.msra.mxu0 0.0
        %1737 = vmatprep.subr.mxu0 0.0
        %1738 = vmatpush1.msra.mxu0 0.0
        %1739 = vmatprep.subr.mxu0 0.0
        %1740 = vmatpush1.msra.mxu0 0.0
        %1741 = vmatprep.subr.mxu0 0.0
        %1742 = vmatpush1.msra.mxu0 0.0
        %1743 = vmatprep.subr.mxu0 0.0
        %1744 = vmatpush1.msra.mxu0 0.0
        %1745 = vmatprep.subr.mxu0 0.0
        %1746 = vmatpush1.msra.mxu0 0.0
        %1747 = vmatprep.subr.mxu0 0.0
        %1748 = vmatpush1.msra.mxu0 0.0
        %1749 = vmatprep.subr.mxu0 0.0
        %1750 = vmatpush1.msra.mxu0 0.0
        %1751 = vmatprep.subr.mxu0 0.0
        %1752 = vmatpush1.msra.mxu0 0.0
        %1753 = vmatprep.subr.mxu0 0.0
        %1754 = vmatpush1.msra.mxu0 0.0
        %1755 = vmatprep.subr.mxu0 0.0
        %1756 = vmatpush1.msra.mxu0 0.0
        %1757 = vmatprep.subr.mxu0 0.0
        %1758 = vmatpush1.msra.mxu0 0.0
        %1759 = vmatprep.subr.mxu0 0.0
        %1760 = vmatpush1.msra.mxu0 0.0
        %1761 = vmatprep.subr.mxu0 0.0
        %1762 = vmatpush1.msra.mxu0 0.0
        %1763 = vmatprep.subr.mxu0 0.0
        %1764 = vmatpush1.msra.mxu0 0.0
        %1765 = vmatprep.subr.mxu0 0.0
        %1766 = vmatpush1.msra.mxu0 %v714
        %1767 = vmatprep.subr.mxu0 0.0
        %1768 = vmatpush2.msra.mxu0 0.0
        %1769 = vmatprep.subr.mxu0 0.0
        %1770 = vmatpush2.msra.mxu0 0.0
        %1771 = vmatprep.subr.mxu0 0.0
        %1772 = vmatpush2.msra.mxu0 0.0
        %1773 = vmatprep.subr.mxu0 0.0
        %1774 = vmatpush2.msra.mxu0 0.0
        %1775 = vmatprep.subr.mxu0 0.0
        %1776 = vmatpush2.msra.mxu0 0.0
        %1777 = vmatprep.subr.mxu0 0.0
        %1778 = vmatpush2.msra.mxu0 0.0
        %1779 = vmatprep.subr.mxu0 0.0
        %1780 = vmatpush2.msra.mxu0 0.0
        %1781 = vmatprep.subr.mxu0 0.0
        %1782 = vmatpush2.msra.mxu0 0.0
        %1783 = vmatprep.subr.mxu0 0.0
        %1784 = vmatpush2.msra.mxu0 0.0
        %1785 = vmatprep.subr.mxu0 0.0
        %1786 = vmatpush2.msra.mxu0 0.0
        %1787 = vmatprep.subr.mxu0 0.0
        %1788 = vmatpush2.msra.mxu0 0.0
        %1789 = vmatprep.subr.mxu0 0.0
        %1790 = vmatpush2.msra.mxu0 0.0
        %1791 = vmatprep.subr.mxu0 0.0
        %1792 = vmatpush2.msra.mxu0 0.0
        %1793 = vmatprep.subr.mxu0 0.0
        %1794 = vmatpush2.msra.mxu0 0.0
        %1795 = vmatprep.subr.mxu0 0.0
        %1796 = vmatpush2.msra.mxu0 0.0
        %1797 = vmatprep.subr.mxu0 0.0
        %1798 = vmatpush2.msra.mxu0 0.0
        %1799 = vmatprep.mubr.f32.mxu0 0.0
        %1800 = vmatmul.mubr.f32.gmra.mxu0 %v1733
        %v1801 = vpop.f32.mrf.mxu0
        %v1802 = vadd.f32 0.0, %v1801
        %v1803 = vpop.f32.mrf.mxu0
        %1804 = vdwg.mxu0
        %v1806 = vsel %vm731, %v1437, 0
        %1808 = vmatprep.subr.mxu0 0.0
        %1809 = vmatpush1.msra.mxu0 0.0
        %1810 = vmatprep.subr.mxu0 0.0
        %1811 = vmatpush1.msra.mxu0 0.0
        %1812 = vmatprep.subr.mxu0 0.0
        %1813 = vmatpush1.msra.mxu0 0.0
        %1814 = vmatprep.subr.mxu0 0.0
        %1815 = vmatpush1.msra.mxu0 0.0
        %1816 = vmatprep.subr.mxu0 0.0
        %1817 = vmatpush1.msra.mxu0 0.0
        %1818 = vmatprep.subr.mxu0 0.0
        %1819 = vmatpush1.msra.mxu0 0.0
        %1820 = vmatprep.subr.mxu0 0.0
        %1821 = vmatpush1.msra.mxu0 0.0
        %1822 = vmatprep.subr.mxu0 0.0
        %1823 = vmatpush1.msra.mxu0 0.0
        %1824 = vmatprep.subr.mxu0 0.0
        %1825 = vmatpush1.msra.mxu0 0.0
        %1826 = vmatprep.subr.mxu0 0.0
        %1827 = vmatpush1.msra.mxu0 0.0
        %1828 = vmatprep.subr.mxu0 0.0
        %1829 = vmatpush1.msra.mxu0 0.0
        %1830 = vmatprep.subr.mxu0 0.0
        %1831 = vmatpush1.msra.mxu0 0.0
        %1832 = vmatprep.subr.mxu0 0.0
        %1833 = vmatpush1.msra.mxu0 0.0
        %1834 = vmatprep.subr.mxu0 0.0
        %1835 = vmatpush1.msra.mxu0 0.0
        %1836 = vmatprep.subr.mxu0 0.0
        %1837 = vmatpush1.msra.mxu0 0.0
        %1838 = vmatprep.subr.mxu0 0.0
        %1839 = vmatpush1.msra.mxu0 %v716
        %1840 = vmatprep.subr.mxu0 0.0
        %1841 = vmatpush2.msra.mxu0 0.0
        %1842 = vmatprep.subr.mxu0 0.0
        %1843 = vmatpush2.msra.mxu0 0.0
        %1844 = vmatprep.subr.mxu0 0.0
        %1845 = vmatpush2.msra.mxu0 0.0
        %1846 = vmatprep.subr.mxu0 0.0
        %1847 = vmatpush2.msra.mxu0 0.0
        %1848 = vmatprep.subr.mxu0 0.0
        %1849 = vmatpush2.msra.mxu0 0.0
        %1850 = vmatprep.subr.mxu0 0.0
        %1851 = vmatpush2.msra.mxu0 0.0
        %1852 = vmatprep.subr.mxu0 0.0
        %1853 = vmatpush2.msra.mxu0 0.0
        %1854 = vmatprep.subr.mxu0 0.0
        %1855 = vmatpush2.msra.mxu0 0.0
        %1856 = vmatprep.subr.mxu0 0.0
        %1857 = vmatpush2.msra.mxu0 0.0
        %1858 = vmatprep.subr.mxu0 0.0
        %1859 = vmatpush2.msra.mxu0 0.0
        %1860 = vmatprep.subr.mxu0 0.0
        %1861 = vmatpush2.msra.mxu0 0.0
        %1862 = vmatprep.subr.mxu0 0.0
        %1863 = vmatpush2.msra.mxu0 0.0
        %1864 = vmatprep.subr.mxu0 0.0
        %1865 = vmatpush2.msra.mxu0 0.0
        %1866 = vmatprep.subr.mxu0 0.0
        %1867 = vmatpush2.msra.mxu0 0.0
        %1868 = vmatprep.subr.mxu0 0.0
        %1869 = vmatpush2.msra.mxu0 0.0
        %1870 = vmatprep.subr.mxu0 0.0
        %1871 = vmatpush2.msra.mxu0 0.0
        %1872 = vmatprep.mubr.f32.mxu0 0.0
        %1873 = vmatmul.mubr.f32.gmra.mxu0 %v1806
        %v1874 = vpop.f32.mrf.mxu0
        %v1875 = vadd.f32 0.0, %v1874
        %v1876 = vpop.f32.mrf.mxu0
        %1877 = vdwg.mxu0
        %v1879 = vsel %vm731, %v1438, 0
        %1881 = vmatprep.subr.mxu0 0.0
        %1882 = vmatpush1.msra.mxu0 0.0
        %1883 = vmatprep.subr.mxu0 0.0
        %1884 = vmatpush1.msra.mxu0 0.0
        %1885 = vmatprep.subr.mxu0 0.0
        %1886 = vmatpush1.msra.mxu0 0.0
        %1887 = vmatprep.subr.mxu0 0.0
        %1888 = vmatpush1.msra.mxu0 0.0
        %1889 = vmatprep.subr.mxu0 0.0
        %1890 = vmatpush1.msra.mxu0 0.0
        %1891 = vmatprep.subr.mxu0 0.0
        %1892 = vmatpush1.msra.mxu0 0.0
        %1893 = vmatprep.subr.mxu0 0.0
        %1894 = vmatpush1.msra.mxu0 0.0
        %1895 = vmatprep.subr.mxu0 0.0
        %1896 = vmatpush1.msra.mxu0 0.0
        %1897 = vmatprep.subr.mxu0 0.0
        %1898 = vmatpush1.msra.mxu0 0.0
        %1899 = vmatprep.subr.mxu0 0.0
        %1900 = vmatpush1.msra.mxu0 0.0
        %1901 = vmatprep.subr.mxu0 0.0
        %1902 = vmatpush1.msra.mxu0 0.0
        %1903 = vmatprep.subr.mxu0 0.0
        %1904 = vmatpush1.msra.mxu0 0.0
        %1905 = vmatprep.subr.mxu0 0.0
        %1906 = vmatpush1.msra.mxu0 0.0
        %1907 = vmatprep.subr.mxu0 0.0
        %1908 = vmatpush1.msra.mxu0 0.0
        %1909 = vmatprep.subr.mxu0 0.0
        %1910 = vmatpush1.msra.mxu0 0.0
        %1911 = vmatprep.subr.mxu0 0.0
        %1912 = vmatpush1.msra.mxu0 %v720
        %1913 = vmatprep.subr.mxu0 0.0
        %1914 = vmatpush2.msra.mxu0 0.0
        %1915 = vmatprep.subr.mxu0 0.0
        %1916 = vmatpush2.msra.mxu0 0.0
        %1917 = vmatprep.subr.mxu0 0.0
        %1918 = vmatpush2.msra.mxu0 0.0
        %1919 = vmatprep.subr.mxu0 0.0
        %1920 = vmatpush2.msra.mxu0 0.0
        %1921 = vmatprep.subr.mxu0 0.0
        %1922 = vmatpush2.msra.mxu0 0.0
        %1923 = vmatprep.subr.mxu0 0.0
        %1924 = vmatpush2.msra.mxu0 0.0
        %1925 = vmatprep.subr.mxu0 0.0
        %1926 = vmatpush2.msra.mxu0 0.0
        %1927 = vmatprep.subr.mxu0 0.0
        %1928 = vmatpush2.msra.mxu0 0.0
        %1929 = vmatprep.subr.mxu0 0.0
        %1930 = vmatpush2.msra.mxu0 0.0
        %1931 = vmatprep.subr.mxu0 0.0
        %1932 = vmatpush2.msra.mxu0 0.0
        %1933 = vmatprep.subr.mxu0 0.0
        %1934 = vmatpush2.msra.mxu0 0.0
        %1935 = vmatprep.subr.mxu0 0.0
        %1936 = vmatpush2.msra.mxu0 0.0
        %1937 = vmatprep.subr.mxu0 0.0
        %1938 = vmatpush2.msra.mxu0 0.0
        %1939 = vmatprep.subr.mxu0 0.0
        %1940 = vmatpush2.msra.mxu0 0.0
        %1941 = vmatprep.subr.mxu0 0.0
        %1942 = vmatpush2.msra.mxu0 0.0
        %1943 = vmatprep.subr.mxu0 0.0
        %1944 = vmatpush2.msra.mxu0 0.0
        %1945 = vmatprep.mubr.f32.mxu0 0.0
        %1946 = vmatmul.mubr.f32.gmra.mxu0 %v1879
        %v1947 = vpop.f32.mrf.mxu0
        %v1948 = vadd.f32 0.0, %v1947
        %v1949 = vpop.f32.mrf.mxu0
        %1950 = vdwg.mxu0
        %v1952 = vsel %vm731, %v1439, 0
        %1954 = vmatprep.subr.mxu0 0.0
        %1955 = vmatpush1.msra.mxu0 0.0
        %1956 = vmatprep.subr.mxu0 0.0
        %1957 = vmatpush1.msra.mxu0 0.0
        %1958 = vmatprep.subr.mxu0 0.0
        %1959 = vmatpush1.msra.mxu0 0.0
        %1960 = vmatprep.subr.mxu0 0.0
        %1961 = vmatpush1.msra.mxu0 0.0
        %1962 = vmatprep.subr.mxu0 0.0
        %1963 = vmatpush1.msra.mxu0 0.0
        %1964 = vmatprep.subr.mxu0 0.0
        %1965 = vmatpush1.msra.mxu0 0.0
        %1966 = vmatprep.subr.mxu0 0.0
        %1967 = vmatpush1.msra.mxu0 0.0
        %1968 = vmatprep.subr.mxu0 0.0
        %1969 = vmatpush1.msra.mxu0 0.0
        %1970 = vmatprep.subr.mxu0 0.0
        %1971 = vmatpush1.msra.mxu0 0.0
        %1972 = vmatprep.subr.mxu0 0.0
        %1973 = vmatpush1.msra.mxu0 0.0
        %1974 = vmatprep.subr.mxu0 0.0
        %1975 = vmatpush1.msra.mxu0 0.0
        %1976 = vmatprep.subr.mxu0 0.0
        %1977 = vmatpush1.msra.mxu0 0.0
        %1978 = vmatprep.subr.mxu0 0.0
        %1979 = vmatpush1.msra.mxu0 0.0
        %1980 = vmatprep.subr.mxu0 0.0
        %1981 = vmatpush1.msra.mxu0 0.0
        %1982 = vmatprep.subr.mxu0 0.0
        %1983 = vmatpush1.msra.mxu0 0.0
        %1984 = vmatprep.subr.mxu0 0.0
        %1985 = vmatpush1.msra.mxu0 %v722
        %1986 = vmatprep.subr.mxu0 0.0
        %1987 = vmatpush2.msra.mxu0 0.0
        %1988 = vmatprep.subr.mxu0 0.0
        %1989 = vmatpush2.msra.mxu0 0.0
        %1990 = vmatprep.subr.mxu0 0.0
        %1991 = vmatpush2.msra.mxu0 0.0
        %1992 = vmatprep.subr.mxu0 0.0
        %1993 = vmatpush2.msra.mxu0 0.0
        %1994 = vmatprep.subr.mxu0 0.0
        %1995 = vmatpush2.msra.mxu0 0.0
        %1996 = vmatprep.subr.mxu0 0.0
        %1997 = vmatpush2.msra.mxu0 0.0
        %1998 = vmatprep.subr.mxu0 0.0
        %1999 = vmatpush2.msra.mxu0 0.0
        %2000 = vmatprep.subr.mxu0 0.0
        %2001 = vmatpush2.msra.mxu0 0.0
        %2002 = vmatprep.subr.mxu0 0.0
        %2003 = vmatpush2.msra.mxu0 0.0
        %2004 = vmatprep.subr.mxu0 0.0
        %2005 = vmatpush2.msra.mxu0 0.0
        %2006 = vmatprep.subr.mxu0 0.0
        %2007 = vmatpush2.msra.mxu0 0.0
        %2008 = vmatprep.subr.mxu0 0.0
        %2009 = vmatpush2.msra.mxu0 0.0
        %2010 = vmatprep.subr.mxu0 0.0
        %2011 = vmatpush2.msra.mxu0 0.0
        %2012 = vmatprep.subr.mxu0 0.0
        %2013 = vmatpush2.msra.mxu0 0.0
        %2014 = vmatprep.subr.mxu0 0.0
        %2015 = vmatpush2.msra.mxu0 0.0
        %2016 = vmatprep.subr.mxu0 0.0
        %2017 = vmatpush2.msra.mxu0 0.0
        %2018 = vmatprep.mubr.f32.mxu0 0.0
        %2019 = vmatmul.mubr.f32.gmra.mxu0 %v1952
        %v2020 = vpop.f32.mrf.mxu0
        %v2021 = vadd.f32 0.0, %v2020
        %v2022 = vpop.f32.mrf.mxu0
        %2023 = vdwg.mxu0
        %2026 = vrot.lane.b32.xlu0 %v1656, 8
        %v2027 = vpop.permute.xlu0 %2026
        %2028 = vrot.lane.b32.xlu0 %v1729, 8
        %v2029 = vpop.permute.xlu0 %2028
        %2034 = vrot.lane.b32.xlu0 %v1802, 16
        %v2035 = vpop.permute.xlu0 %2034
        %2036 = vrot.lane.b32.xlu0 %v1875, 16
        %v2037 = vpop.permute.xlu0 %2036
        %2042 = vrot.lane.b32.xlu0 %v1948, 24
        %v2043 = vpop.permute.xlu0 %2042
        %2044 = vrot.lane.b32.xlu0 %v2021, 24
        %v2045 = vpop.permute.xlu0 %2044
        %v2048 = vsel %vm731, %v1510, %v2027
        %v2049 = vsel %vm731, %v1583, %v2029
        %vm2050 = vcmask 130048
        %v2051 = vsel %vm2050, %v2048, %v2035
        %v2052 = vsel %vm2050, %v2049, %v2037
        %vm2053 = vcmask 195584
        %v2054 = vsel %vm2053, %v2051, %v2043
        %v2055 = vsel %vm2053, %v2052, %v2045
        %v2056 = vadd.f32 %v410, %v2054
        %v2057 = vadd.f32 %v411, %v2055
        %2058 = vst.msk [vmem:[%s406] sm:$0xff] %vm423, %v2056
        %2059 = vst.msk [vmem:[%s406 + $0x8] sm:$0xff] %vm423, %v2057
        %s2060 = sand.u32 %s215, 1
        %s2061 = scalar_lea.sflag [#allocation4], %s2060
        %s2062 = sand.u32 %s215, 1
        %s2063 = smul.addr %s2062, 16
        %s2064 = scalar_lea.vmem [#allocation11], %s2063
        // Predicated region
        $region73: #{tpu_custom_call.1} parent=51 // pred_check
          %p2065 = pneg %p225
        $region74: #{tpu_custom_call.1} parent=51 // pred_check_branch
          %2067 = sbr.rel (%p2065) target = $region76
        $region75: #{tpu_custom_call.1} parent=51 // pred_region
          %s2068 = smul.u32 2, %s29
          %s2070 = ssub.s32 256, 256
          %2071 = vsyncadd %s2061, %s2070
          %s2072 = smul.addr %s2068, 128
          %s2073 = scalar_lea.hbm %s8, %s2072
          %s2074 = sshll.u32 %s2064, 4
          %s2075 = int_to_ptr.vmem [resolvable:$true] %s2074
          %2080 = dma.vmem_to_hbm [thread:$0]  %s2075, 256, %s2073, %s2061, 128, 128, 8
        $region76: #{tpu_custom_call.1} parent=51 // pred_fallthru
          _
      $region52: #{tpu_custom_call.1} parent=5 // pred_fallthru
        _
      %p2081 = scmp.le.s32.totalorder 2, %s24
      // Predicated region
      $region77: #{tpu_custom_call.1} parent=5 // pred_check
        %p2082 = pneg %p2081
      $region78: #{tpu_custom_call.1} parent=5 // pred_check_branch
        %2084 = sbr.rel (%p2082) target = $region80
      $region79: #{tpu_custom_call.1} parent=5 // pred_region
        %s2085 = ssub.s32 %s24, 2
        // Predicated region
        $region81: #{tpu_custom_call.1} parent=79 // pred_check
          %p2086 = pneg %p231
        $region82: #{tpu_custom_call.1} parent=79 // pred_check_branch
          %2088 = sbr.rel (%p2086) target = $region84
        $region83: #{tpu_custom_call.1} parent=79 // pred_region
          %s2089 = sand.u32 %s216, 1
          %s2090 = scalar_lea.sflag [#allocation4], %s2089
          %s2091 = sand.u32 %s216, 1
          %s2092 = smul.addr %s2091, 16
          %s2093 = scalar_lea.vmem [#allocation11], %s2092
          %2094 = dma.done %s2090, 256
        $region84: #{tpu_custom_call.1} parent=79 // pred_fallthru
          _
      $region80: #{tpu_custom_call.1} parent=5 // pred_fallthru
        _
    $region6: #{tpu_custom_call.1} parent=1 // loop_footer
      %s28 = sadd.s32 1, %s24
    $region7: #{tpu_custom_call.1} parent=1 // loop_footer_branch
      %23 = sbr.rel target = $region3
    $region8: #{tpu_custom_call.1} parent=1 // loop_exit
      _
    %2095 = vsyncpa [#allocation3], 1
    %s2096 = scalar_lea.sflag [#allocation3], 1
    %2097 = vsyncpa %s2096, 1
    %2098 = vsyncpa [#allocation6], 1
    %s2099 = scalar_lea.sflag [#allocation6], 1
    %2100 = vsyncpa %s2099, 1
    %2101 = vsyncpa [#allocation9], 1
    %2102 = vsyncpa [#allocation4], 1
    %s2103 = scalar_lea.sflag [#allocation4], 1
    %2104 = vsyncpa %s2103, 1

</llo_original>
